<compile_context>
chip_gen: v5e
topology: v5e:2x2
jax: 0.10.0
libtpu: 0.0.40
codegen_flags: <defaults>
</compile_context>

<pallas_src>
import math
from functools import partial

import numpy as np
import jax
import jax.numpy as jnp
from jax import lax
from jax.experimental import pallas as pl
from jax.experimental.pallas import tpu as pltpu

BN_EPS = 1e-5


# ------------------------------ fused kernel --------------------------------

def _make_fused_kernel(cfgs, pad_off):
    """Builds the fused conv+BN+ReLU x nScales kernel for static layer cfgs."""
    n_layers = len(cfgs)
    n_sub = sum(1 for c in cfgs if c["stride"] == 2)

    def kernel(*refs):
        it = iter(refs)
        x_ref = next(it)
        w_refs = [next(it) for _ in range(n_layers)]
        gb_refs = [next(it) for _ in range(n_layers)]
        s_refs = [next(it) for _ in range(n_sub)]
        y_refs = [next(it) for _ in range(n_layers)]
        pad_ref = next(it)     # (Cmax, 2*pad_off + Mmax) f32 padded-activation scratch
        taps_ref = next(it)    # (9*Cmax, Mmax)            f32 im2col taps scratch

        # Defensive: the border masks never select margin/garbage columns, but
        # keep the scratch deterministic.
        pad_ref[...] = jnp.zeros(pad_ref.shape, pad_ref.dtype)

        act = x_ref[...]                                   # (Cin0, M0) f32
        s_idx = 0
        for l, cfg in enumerate(cfgs):
            C, H, W = cfg["cin"], cfg["h"], cfg["w"]
            Cout, stride = cfg["cout"], cfg["stride"]
            M, Mo = cfg["m_in"], cfg["m_out"]
            log2w = W.bit_length() - 1

            # ---- activation into zero-margined scratch ----------------------
            pad_ref[0:C, pad_off:pad_off + M] = act

            # ---- flattened (y, x) positions for border masking --------------
            m_iota = lax.broadcasted_iota(jnp.int32, (1, M), 1)
            xpos = m_iota & (W - 1)
            ypos = (m_iota >> log2w) & (H - 1)

            # ---- in-kernel im2col: 9 shifted lane slices -> taps scratch ----
            for dy in range(3):
                for dx in range(3):
                    oy, ox = dy - 1, dx - 1
                    shift = oy * W + ox
                    piece = pad_ref[0:C, pad_off + shift:pad_off + shift + M]
                    conds = []
                    if oy < 0:
                        conds.append(ypos >= -oy)
                    if oy > 0:
                        conds.append(ypos < H - oy)
                    if ox < 0:
                        conds.append(xpos >= -ox)
                    if ox > 0:
                        conds.append(xpos < W - ox)
                    if conds:
                        valid = conds[0]
                        for c in conds[1:]:
                            valid = valid & c
                        piece = jnp.where(valid, piece, 0.0)
                    r0 = (dy * 3 + dx) * C
                    taps_ref[r0:r0 + C, 0:M] = piece

            # ---- conv: single K = 9*Cin MXU contraction, lane-dense acc -----
            conv = jnp.dot(w_refs[l][...], taps_ref[0:9 * C, 0:M],
                           preferred_element_type=jnp.float32)      # (Cout, M)

            # ---- stride-2: column subsample via 0/1 selection matmul --------
            if stride == 2:
                conv = jnp.dot(conv, s_refs[s_idx][...],
                               preferred_element_type=jnp.float32)  # (Cout, Mo)
                s_idx += 1

            # ---- training-mode BatchNorm2d (biased var) + ReLU ---------------
            inv_mo = 1.0 / Mo
            mean = jnp.sum(conv, axis=1, keepdims=True) * inv_mo    # (Cout, 1)
            cent = conv - mean
            var = jnp.sum(cent * cent, axis=1, keepdims=True) * inv_mo
            gamma = gb_refs[l][:, 0:1]
            beta = gb_refs[l][:, 1:2]
            scale = gamma * lax.rsqrt(var + BN_EPS)
            out = jnp.maximum(cent * scale + beta, 0.0)             # (Cout, Mo)

            y_refs[l][...] = out.astype(y_refs[l].dtype)
            act = out                                               # next layer input

    return kernel


# ------------------------------ host-side glue -------------------------------

def _make_subsample_matrix(n, h, w):
    """0/1 matrix selecting even-(y,x) columns: (N*H*W, N*(H//2)*(W//2))."""
    ho, wo = h // 2, w // 2
    s = np.zeros((n * h * w, n * ho * wo), np.float32)
    for bi in range(n):
        for yo in range(ho):
            for xo in range(wo):
                mo = (bi * ho + yo) * wo + xo
                mi = (bi * h + 2 * yo) * w + 2 * xo
                s[mi, mo] = 1.0
    return s


def _layer_configs(x_shape, wms, strides):
    n, cin, h, w = x_shape
    cfgs = []
    for wm, stride in zip(wms, strides):
        cout = int(wm.shape[0])
        assert int(wm.shape[1]) == 9 * cin
        assert (h & (h - 1)) == 0 and (w & (w - 1)) == 0, \
            "in-kernel border masks assume power-of-two H/W"
        ho, wo = (h, w) if stride == 1 else (h // 2, w // 2)
        cfgs.append(dict(cin=cin, cout=cout, h=h, w=w, ho=ho, wo=wo,
                         stride=stride, m_in=n * h * w, m_out=n * ho * wo))
        cin, h, w = cout, ho, wo
    return tuple(cfgs)


@partial(jax.jit, static_argnames=("strides",))
def msdn_first_layer_forward(x_nchw, wms, gbs, strides):
    """Fused MSDNFirstLayer forward. x: NCHW f32; wms[l]: (Cout, 9*Cin) f32;
    gbs[l]: (Cout, 2) f32 [gamma|beta]. Returns list of NCHW activations."""
    n, cin, h, w = x_nchw.shape
    cfgs = _layer_configs(x_nchw.shape, wms, strides)
    pad_off = max(c["w"] for c in cfgs) + 1
    max_m = max(c["m_in"] for c in cfgs)
    max_c = max(c["cin"] for c in cfgs)
    max_k = max(9 * c["cin"] for c in cfgs)

    # 0/1 subsample matrices for the stride-2 layers (trace-time constants).
    subs = tuple(jnp.asarray(_make_subsample_matrix(n, c["h"], c["w"]))
                 for c in cfgs if c["stride"] == 2)

    # NCHW -> channel-major lane-dense (Cin, N*H*W): leading-dim transpose only.
    x2d = jnp.transpose(x_nchw, (1, 0, 2, 3)).reshape(cin, n * h * w)

    kernel = _make_fused_kernel(cfgs, pad_off)

    in_arrays = (x2d, *wms, *gbs, *subs)
    in_specs = [pl.BlockSpec(a.shape, lambda i: (0, 0)) for a in in_arrays]
    out_shape = tuple(jax.ShapeDtypeStruct((c["cout"], c["m_out"]), jnp.float32)
                      for c in cfgs)
    out_specs = tuple(pl.BlockSpec(s.shape, lambda i: (0, 0)) for s in out_shape)

    ys = pl.pallas_call(
        kernel,
        out_shape=out_shape,
        grid=(1,),
        in_specs=in_specs,
        out_specs=out_specs,
        scratch_shapes=[
            pltpu.VMEM((max(8, max_c), 2 * pad_off + max_m), jnp.float32),
            pltpu.VMEM((max_k, max_m), jnp.float32),
        ],
        compiler_params=pltpu.CompilerParams(
            dimension_semantics=("arbitrary",)),
    )(*in_arrays)

    outs = []
    for y, c in zip(ys, cfgs):
        # (Cout, N*Ho*Wo) is already channel-major -> NCHW via leading-dim swap.
        outs.append(jnp.transpose(
            y.reshape(c["cout"], n, c["ho"], c["wo"]), (1, 0, 2, 3)))
    return outs


# --------------------------- parameters / reference --------------------------

class Args:
    data = 'cifar10'
    nScales = 3
    grFactor = (1, 2, 4)


def init_msdn_first_layer_params(key, n_in, n_out, args):
    """Synthetic parameters with the torch module's shapes (OIHW conv weights,
    BN gamma/beta), He-normal init like MSDNet."""
    params = []
    cin = n_in
    for i in range(args.nScales):
        cout = n_out * args.grFactor[i]
        k = jax.random.fold_in(key, i)
        w = jax.random.normal(k, (cout, cin, 3, 3), jnp.float32) * math.sqrt(2.0 / (cin * 9))
        params.append(dict(w=w,
                           gamma=jnp.ones((cout,), jnp.float32),
                           beta=jnp.zeros((cout,), jnp.float32),
                           stride=1 if i == 0 else 2))
        cin = cout
    return params


def prepare_params(params):
    """One-time repack of torch-layout params into the kernel's matmul layout."""
    wms, gbs, strides = [], [], []
    for p in params:
        cout, cin = p['w'].shape[0], p['w'].shape[1]
        # taps rows are (dy, dx)-major / channel-minor -> weight columns likewise
        wms.append(jnp.transpose(p['w'], (0, 2, 3, 1)).reshape(cout, 9 * cin))
        gbs.append(jnp.stack([p['gamma'], p['beta']], axis=1))      # (Cout, 2)
        strides.append(int(p['stride']))
    return tuple(wms), tuple(gbs), tuple(strides)


def reference_forward(x_nchw, params):
    """Pure-JAX reference: Conv2d(no bias) + training-mode BN + ReLU per layer."""
    outs, x = [], x_nchw
    for p in params:
        y = lax.conv_general_dilated(
            x, p['w'], window_strides=(p['stride'],) * 2,
            padding=((1, 1), (1, 1)),
            dimension_numbers=('NCHW', 'OIHW', 'NCHW'),
            precision=lax.Precision.HIGHEST)
        mean = jnp.mean(y, axis=(0, 2, 3), keepdims=True)
        var = jnp.mean((y - mean) ** 2, axis=(0, 2, 3), keepdims=True)
        g = p['gamma'].reshape(1, -1, 1, 1)
        b = p['beta'].reshape(1, -1, 1, 1)
        y = jnp.maximum((y - mean) * (g * lax.rsqrt(var + BN_EPS)) + b, 0.0)
        outs.append(y)
        x = y
    return outs


# ----------------------------------- main ------------------------------------

if __name__ == "__main__":
    key = jax.random.PRNGKey(0)
    n_in, n_out = 3, 8              # per-scale channels: 8, 16, 32
    args = Args()

    params = init_msdn_first_layer_params(key, n_in, n_out, args)
    wms, gbs, strides = prepare_params(params)

    x = jax.random.normal(jax.random.fold_in(key, 123), (2, n_in, 16, 16),
                          dtype=jnp.float32)          # NCHW, like torch

    outs = msdn_first_layer_forward(x, wms, gbs, strides=strides)
    outs = [jax.block_until_ready(o) for o in outs]

    expected = [(2, 8, 16, 16), (2, 16, 8, 8), (2, 32, 4, 4)]
    assert [tuple(o.shape) for o in outs] == expected, [tuple(o.shape) for o in outs]
    assert all(bool(jnp.all(jnp.isfinite(o))) for o in outs)
    assert all(bool(jnp.all(o >= 0)) for o in outs)   # ReLU outputs

    refs = reference_forward(x, params)
    for o, r in zip(outs, refs):
        err = float(jnp.max(jnp.abs(o - r)))
        assert err < 5e-2, f"max abs err {err}"

    print("KERNEL_OK")
</pallas_src>

<mosaic_0001>
module attributes {stable_mosaic.version = 11 : i64} {
  func.func @kernel(%arg0: i32, %arg1: memref<3x512xf32, #tpu.memory_space<vmem>>, %arg2: memref<8x27xf32, #tpu.memory_space<vmem>>, %arg3: memref<16x72xf32, #tpu.memory_space<vmem>>, %arg4: memref<32x144xf32, #tpu.memory_space<vmem>>, %arg5: memref<8x2xf32, #tpu.memory_space<vmem>>, %arg6: memref<16x2xf32, #tpu.memory_space<vmem>>, %arg7: memref<32x2xf32, #tpu.memory_space<vmem>>, %arg8: memref<512x128xf32, #tpu.memory_space<vmem>>, %arg9: memref<128x32xf32, #tpu.memory_space<vmem>>, %arg10: memref<8x512xf32, #tpu.memory_space<vmem>>, %arg11: memref<16x128xf32, #tpu.memory_space<vmem>>, %arg12: memref<32x32xf32, #tpu.memory_space<vmem>>, %arg13: memref<16x546xf32, #tpu.memory_space<vmem>>, %arg14: memref<144x512xf32, #tpu.memory_space<vmem>>) attributes {dimension_semantics = [#tpu.dimension_semantics<arbitrary>], iteration_bounds = array<i64: 1>, scalar_prefetch = 0 : i64, scratch_operands = 2 : i64, tpu.core_type = #tpu.core_type<tc>, window_params = [{pipeline_mode = #tpu.pipeline_mode<synchronous>, transform_indices = @transform_0, window_bounds = array<i64: 3, 512>}, {pipeline_mode = #tpu.pipeline_mode<synchronous>, transform_indices = @transform_1, window_bounds = array<i64: 8, 27>}, {pipeline_mode = #tpu.pipeline_mode<synchronous>, transform_indices = @transform_2, window_bounds = array<i64: 16, 72>}, {pipeline_mode = #tpu.pipeline_mode<synchronous>, transform_indices = @transform_3, window_bounds = array<i64: 32, 144>}, {pipeline_mode = #tpu.pipeline_mode<synchronous>, transform_indices = @transform_4, window_bounds = array<i64: 8, 2>}, {pipeline_mode = #tpu.pipeline_mode<synchronous>, transform_indices = @transform_5, window_bounds = array<i64: 16, 2>}, {pipeline_mode = #tpu.pipeline_mode<synchronous>, transform_indices = @transform_6, window_bounds = array<i64: 32, 2>}, {pipeline_mode = #tpu.pipeline_mode<synchronous>, transform_indices = @transform_7, window_bounds = array<i64: 512, 128>}, {pipeline_mode = #tpu.pipeline_mode<synchronous>, transform_indices = @transform_8, window_bounds = array<i64: 128, 32>}, {pipeline_mode = #tpu.pipeline_mode<synchronous>, transform_indices = @transform_9, window_bounds = array<i64: 8, 512>}, {pipeline_mode = #tpu.pipeline_mode<synchronous>, transform_indices = @transform_10, window_bounds = array<i64: 16, 128>}, {pipeline_mode = #tpu.pipeline_mode<synchronous>, transform_indices = @transform_11, window_bounds = array<i64: 32, 32>}]} {
    %cst = arith.constant 0.000000e+00 : f32
    %0 = vector.broadcast %cst : f32 to vector<16x546xf32>
    %c0 = arith.constant 0 : index
    %c0_0 = arith.constant 0 : index
    %1 = vector.load %arg13[%c0, %c0_0] : memref<16x546xf32, #tpu.memory_space<vmem>>, vector<16x546xf32>
    tpu.vector_store %arg13[%c0, %c0_0], %0 {strides = array<i32>} : memref<16x546xf32, #tpu.memory_space<vmem>>, vector<16x546xf32>,
    %c0_1 = arith.constant 0 : index
    %c0_2 = arith.constant 0 : index
    %2 = vector.load %arg1[%c0_1, %c0_2] : memref<3x512xf32, #tpu.memory_space<vmem>>, vector<3x512xf32>
    %c0_3 = arith.constant 0 : index
    %c17 = arith.constant 17 : index
    %3 = vector.load %arg13[%c0_3, %c17] : memref<16x546xf32, #tpu.memory_space<vmem>>, vector<3x512xf32>
    tpu.vector_store %arg13[%c0_3, %c17], %2 {strides = array<i32>} : memref<16x546xf32, #tpu.memory_space<vmem>>, vector<3x512xf32>,
    %4 = tpu.iota {dimensions = array<i32: 1>} : vector<1x512xi32>
    %c15_i32 = arith.constant 15 : i32
    %5 = vector.broadcast %c15_i32 : i32 to vector<1x512xi32>
    %6 = arith.andi %4, %5 : vector<1x512xi32>
    %c4_i32 = arith.constant 4 : i32
    %7 = vector.broadcast %c4_i32 : i32 to vector<1x512xi32>
    %8 = arith.shrsi %4, %7 : vector<1x512xi32>
    %c15_i32_4 = arith.constant 15 : i32
    %9 = vector.broadcast %c15_i32_4 : i32 to vector<1x512xi32>
    %10 = arith.andi %8, %9 : vector<1x512xi32>
    %c0_5 = arith.constant 0 : index
    %c0_6 = arith.constant 0 : index
    %11 = vector.load %arg13[%c0_5, %c0_6] : memref<16x546xf32, #tpu.memory_space<vmem>>, vector<3x512xf32>
    %c1_i32 = arith.constant 1 : i32
    %12 = vector.broadcast %c1_i32 : i32 to vector<1x512xi32>
    %13 = arith.cmpi sge, %10, %12 : vector<1x512xi32>
    %c1_i32_7 = arith.constant 1 : i32
    %14 = vector.broadcast %c1_i32_7 : i32 to vector<1x512xi32>
    %15 = arith.cmpi sge, %6, %14 : vector<1x512xi32>
    %16 = arith.andi %13, %15 : vector<1x512xi1>
    %cst_8 = arith.constant 0.000000e+00 : f32
    %17 = vector.shape_cast %16 : vector<1x512xi1> to vector<1x512xi1>
    %18 = vector.broadcast %17 : vector<1x512xi1> to vector<3x512xi1>
    %19 = vector.broadcast %cst_8 : f32 to vector<3x512xf32>
    %20 = arith.select %18, %11, %19 : vector<3x512xi1>, vector<3x512xf32>
    %c0_9 = arith.constant 0 : index
    %c0_10 = arith.constant 0 : index
    %21 = vector.load %arg14[%c0_9, %c0_10] : memref<144x512xf32, #tpu.memory_space<vmem>>, vector<3x512xf32>
    tpu.vector_store %arg14[%c0_9, %c0_10], %20 {strides = array<i32>} : memref<144x512xf32, #tpu.memory_space<vmem>>, vector<3x512xf32>,
    %c0_11 = arith.constant 0 : index
    %c1 = arith.constant 1 : index
    %22 = vector.load %arg13[%c0_11, %c1] : memref<16x546xf32, #tpu.memory_space<vmem>>, vector<3x512xf32>
    %c1_i32_12 = arith.constant 1 : i32
    %23 = vector.broadcast %c1_i32_12 : i32 to vector<1x512xi32>
    %24 = arith.cmpi sge, %10, %23 : vector<1x512xi32>
    %cst_13 = arith.constant 0.000000e+00 : f32
    %25 = vector.shape_cast %24 : vector<1x512xi1> to vector<1x512xi1>
    %26 = vector.broadcast %25 : vector<1x512xi1> to vector<3x512xi1>
    %27 = vector.broadcast %cst_13 : f32 to vector<3x512xf32>
    %28 = arith.select %26, %22, %27 : vector<3x512xi1>, vector<3x512xf32>
    %c3 = arith.constant 3 : index
    %c0_14 = arith.constant 0 : index
    %29 = vector.load %arg14[%c3, %c0_14] : memref<144x512xf32, #tpu.memory_space<vmem>>, vector<3x512xf32>
    tpu.vector_store %arg14[%c3, %c0_14], %28 {strides = array<i32>} : memref<144x512xf32, #tpu.memory_space<vmem>>, vector<3x512xf32>,
    %c0_15 = arith.constant 0 : index
    %c2 = arith.constant 2 : index
    %30 = vector.load %arg13[%c0_15, %c2] : memref<16x546xf32, #tpu.memory_space<vmem>>, vector<3x512xf32>
    %c1_i32_16 = arith.constant 1 : i32
    %31 = vector.broadcast %c1_i32_16 : i32 to vector<1x512xi32>
    %32 = arith.cmpi sge, %10, %31 : vector<1x512xi32>
    %c15_i32_17 = arith.constant 15 : i32
    %33 = vector.broadcast %c15_i32_17 : i32 to vector<1x512xi32>
    %34 = arith.cmpi slt, %6, %33 : vector<1x512xi32>
    %35 = arith.andi %32, %34 : vector<1x512xi1>
    %cst_18 = arith.constant 0.000000e+00 : f32
    %36 = vector.shape_cast %35 : vector<1x512xi1> to vector<1x512xi1>
    %37 = vector.broadcast %36 : vector<1x512xi1> to vector<3x512xi1>
    %38 = vector.broadcast %cst_18 : f32 to vector<3x512xf32>
    %39 = arith.select %37, %30, %38 : vector<3x512xi1>, vector<3x512xf32>
    %c6 = arith.constant 6 : index
    %c0_19 = arith.constant 0 : index
    %40 = vector.load %arg14[%c6, %c0_19] : memref<144x512xf32, #tpu.memory_space<vmem>>, vector<3x512xf32>
    tpu.vector_store %arg14[%c6, %c0_19], %39 {strides = array<i32>} : memref<144x512xf32, #tpu.memory_space<vmem>>, vector<3x512xf32>,
    %c0_20 = arith.constant 0 : index
    %c16 = arith.constant 16 : index
    %41 = vector.load %arg13[%c0_20, %c16] : memref<16x546xf32, #tpu.memory_space<vmem>>, vector<3x512xf32>
    %c1_i32_21 = arith.constant 1 : i32
    %42 = vector.broadcast %c1_i32_21 : i32 to vector<1x512xi32>
    %43 = arith.cmpi sge, %6, %42 : vector<1x512xi32>
    %cst_22 = arith.constant 0.000000e+00 : f32
    %44 = vector.shape_cast %43 : vector<1x512xi1> to vector<1x512xi1>
    %45 = vector.broadcast %44 : vector<1x512xi1> to vector<3x512xi1>
    %46 = vector.broadcast %cst_22 : f32 to vector<3x512xf32>
    %47 = arith.select %45, %41, %46 : vector<3x512xi1>, vector<3x512xf32>
    %c9 = arith.constant 9 : index
    %c0_23 = arith.constant 0 : index
    %48 = vector.load %arg14[%c9, %c0_23] : memref<144x512xf32, #tpu.memory_space<vmem>>, vector<3x512xf32>
    tpu.vector_store %arg14[%c9, %c0_23], %47 {strides = array<i32>} : memref<144x512xf32, #tpu.memory_space<vmem>>, vector<3x512xf32>,
    %c0_24 = arith.constant 0 : index
    %c17_25 = arith.constant 17 : index
    %49 = vector.load %arg13[%c0_24, %c17_25] : memref<16x546xf32, #tpu.memory_space<vmem>>, vector<3x512xf32>
    %c12 = arith.constant 12 : index
    %c0_26 = arith.constant 0 : index
    %50 = vector.load %arg14[%c12, %c0_26] : memref<144x512xf32, #tpu.memory_space<vmem>>, vector<3x512xf32>
    tpu.vector_store %arg14[%c12, %c0_26], %49 {strides = array<i32>} : memref<144x512xf32, #tpu.memory_space<vmem>>, vector<3x512xf32>,
    %c0_27 = arith.constant 0 : index
    %c18 = arith.constant 18 : index
    %51 = vector.load %arg13[%c0_27, %c18] : memref<16x546xf32, #tpu.memory_space<vmem>>, vector<3x512xf32>
    %c15_i32_28 = arith.constant 15 : i32
    %52 = vector.broadcast %c15_i32_28 : i32 to vector<1x512xi32>
    %53 = arith.cmpi slt, %6, %52 : vector<1x512xi32>
    %cst_29 = arith.constant 0.000000e+00 : f32
    %54 = vector.shape_cast %53 : vector<1x512xi1> to vector<1x512xi1>
    %55 = vector.broadcast %54 : vector<1x512xi1> to vector<3x512xi1>
    %56 = vector.broadcast %cst_29 : f32 to vector<3x512xf32>
    %57 = arith.select %55, %51, %56 : vector<3x512xi1>, vector<3x512xf32>
    %c15 = arith.constant 15 : index
    %c0_30 = arith.constant 0 : index
    %58 = vector.load %arg14[%c15, %c0_30] : memref<144x512xf32, #tpu.memory_space<vmem>>, vector<3x512xf32>
    tpu.vector_store %arg14[%c15, %c0_30], %57 {strides = array<i32>} : memref<144x512xf32, #tpu.memory_space<vmem>>, vector<3x512xf32>,
    %c0_31 = arith.constant 0 : index
    %c32 = arith.constant 32 : index
    %59 = vector.load %arg13[%c0_31, %c32] : memref<16x546xf32, #tpu.memory_space<vmem>>, vector<3x512xf32>
    %c15_i32_32 = arith.constant 15 : i32
    %60 = vector.broadcast %c15_i32_32 : i32 to vector<1x512xi32>
    %61 = arith.cmpi slt, %10, %60 : vector<1x512xi32>
    %c1_i32_33 = arith.constant 1 : i32
    %62 = vector.broadcast %c1_i32_33 : i32 to vector<1x512xi32>
    %63 = arith.cmpi sge, %6, %62 : vector<1x512xi32>
    %64 = arith.andi %61, %63 : vector<1x512xi1>
    %cst_34 = arith.constant 0.000000e+00 : f32
    %65 = vector.shape_cast %64 : vector<1x512xi1> to vector<1x512xi1>
    %66 = vector.broadcast %65 : vector<1x512xi1> to vector<3x512xi1>
    %67 = vector.broadcast %cst_34 : f32 to vector<3x512xf32>
    %68 = arith.select %66, %59, %67 : vector<3x512xi1>, vector<3x512xf32>
    %c18_35 = arith.constant 18 : index
    %c0_36 = arith.constant 0 : index
    %69 = vector.load %arg14[%c18_35, %c0_36] : memref<144x512xf32, #tpu.memory_space<vmem>>, vector<3x512xf32>
    tpu.vector_store %arg14[%c18_35, %c0_36], %68 {strides = array<i32>} : memref<144x512xf32, #tpu.memory_space<vmem>>, vector<3x512xf32>,
    %c0_37 = arith.constant 0 : index
    %c33 = arith.constant 33 : index
    %70 = vector.load %arg13[%c0_37, %c33] : memref<16x546xf32, #tpu.memory_space<vmem>>, vector<3x512xf32>
    %c15_i32_38 = arith.constant 15 : i32
    %71 = vector.broadcast %c15_i32_38 : i32 to vector<1x512xi32>
    %72 = arith.cmpi slt, %10, %71 : vector<1x512xi32>
    %cst_39 = arith.constant 0.000000e+00 : f32
    %73 = vector.shape_cast %72 : vector<1x512xi1> to vector<1x512xi1>
    %74 = vector.broadcast %73 : vector<1x512xi1> to vector<3x512xi1>
    %75 = vector.broadcast %cst_39 : f32 to vector<3x512xf32>
    %76 = arith.select %74, %70, %75 : vector<3x512xi1>, vector<3x512xf32>
    %c21 = arith.constant 21 : index
    %c0_40 = arith.constant 0 : index
    %77 = vector.load %arg14[%c21, %c0_40] : memref<144x512xf32, #tpu.memory_space<vmem>>, vector<3x512xf32>
    tpu.vector_store %arg14[%c21, %c0_40], %76 {strides = array<i32>} : memref<144x512xf32, #tpu.memory_space<vmem>>, vector<3x512xf32>,
    %c0_41 = arith.constant 0 : index
    %c34 = arith.constant 34 : index
    %78 = vector.load %arg13[%c0_41, %c34] : memref<16x546xf32, #tpu.memory_space<vmem>>, vector<3x512xf32>
    %c15_i32_42 = arith.constant 15 : i32
    %79 = vector.broadcast %c15_i32_42 : i32 to vector<1x512xi32>
    %80 = arith.cmpi slt, %10, %79 : vector<1x512xi32>
    %c15_i32_43 = arith.constant 15 : i32
    %81 = vector.broadcast %c15_i32_43 : i32 to vector<1x512xi32>
    %82 = arith.cmpi slt, %6, %81 : vector<1x512xi32>
    %83 = arith.andi %80, %82 : vector<1x512xi1>
    %cst_44 = arith.constant 0.000000e+00 : f32
    %84 = vector.shape_cast %83 : vector<1x512xi1> to vector<1x512xi1>
    %85 = vector.broadcast %84 : vector<1x512xi1> to vector<3x512xi1>
    %86 = vector.broadcast %cst_44 : f32 to vector<3x512xf32>
    %87 = arith.select %85, %78, %86 : vector<3x512xi1>, vector<3x512xf32>
    %c24 = arith.constant 24 : index
    %c0_45 = arith.constant 0 : index
    %88 = vector.load %arg14[%c24, %c0_45] : memref<144x512xf32, #tpu.memory_space<vmem>>, vector<3x512xf32>
    tpu.vector_store %arg14[%c24, %c0_45], %87 {strides = array<i32>} : memref<144x512xf32, #tpu.memory_space<vmem>>, vector<3x512xf32>,
    %c0_46 = arith.constant 0 : index
    %c0_47 = arith.constant 0 : index
    %89 = vector.load %arg2[%c0_46, %c0_47] : memref<8x27xf32, #tpu.memory_space<vmem>>, vector<8x27xf32>
    %c0_48 = arith.constant 0 : index
    %c0_49 = arith.constant 0 : index
    %90 = vector.load %arg14[%c0_48, %c0_49] : memref<144x512xf32, #tpu.memory_space<vmem>>, vector<27x512xf32>
    %cst_50 = arith.constant dense<0.000000e+00> : vector<8x512xf32>
    %91 = tpu.matmul %89, %90, %cst_50 {dimension_numbers = #tpu.dot_dimension_numbers<[1], [0], [0], [1], [0, 0, 1, 1], [], []>} : vector<8x27xf32>, vector<27x512xf32>, vector<8x512xf32> -> vector<8x512xf32>
    %cst_51 = arith.constant dense<0.000000e+00> : vector<8xf32>
    %92 = vector.multi_reduction <add>, %91, %cst_51 [1] : vector<8x512xf32> to vector<8xf32>
    %93 = vector.shape_cast %92 : vector<8xf32> to vector<8x1xf32>
    %cst_52 = arith.constant 0.001953125 : f32
    %94 = vector.broadcast %cst_52 : f32 to vector<8x1xf32>
    %95 = arith.mulf %93, %94 : vector<8x1xf32>
    %96 = vector.broadcast %95 : vector<8x1xf32> to vector<8x512xf32>
    %97 = arith.subf %91, %96 : vector<8x512xf32>
    %98 = arith.mulf %97, %97 : vector<8x512xf32>
    %cst_53 = arith.constant dense<0.000000e+00> : vector<8xf32>
    %99 = vector.multi_reduction <add>, %98, %cst_53 [1] : vector<8x512xf32> to vector<8xf32>
    %100 = vector.shape_cast %99 : vector<8xf32> to vector<8x1xf32>
    %cst_54 = arith.constant 0.001953125 : f32
    %101 = vector.broadcast %cst_54 : f32 to vector<8x1xf32>
    %102 = arith.mulf %100, %101 : vector<8x1xf32>
    %c0_55 = arith.constant 0 : index
    %c0_56 = arith.constant 0 : index
    %103 = vector.load %arg5[%c0_55, %c0_56] : memref<8x2xf32, #tpu.memory_space<vmem>>, vector<8x1xf32>
    %c0_57 = arith.constant 0 : index
    %c1_58 = arith.constant 1 : index
    %104 = vector.load %arg5[%c0_57, %c1_58] : memref<8x2xf32, #tpu.memory_space<vmem>>, vector<8x1xf32>
    %cst_59 = arith.constant 9.99999974E-6 : f32
    %105 = vector.broadcast %cst_59 : f32 to vector<8x1xf32>
    %106 = arith.addf %102, %105 : vector<8x1xf32>
    %107 = math.rsqrt %106 : vector<8x1xf32>
    %108 = arith.mulf %103, %107 : vector<8x1xf32>
    %109 = vector.broadcast %108 : vector<8x1xf32> to vector<8x512xf32>
    %110 = arith.mulf %97, %109 : vector<8x512xf32>
    %111 = vector.broadcast %104 : vector<8x1xf32> to vector<8x512xf32>
    %112 = arith.addf %110, %111 : vector<8x512xf32>
    %cst_60 = arith.constant 0.000000e+00 : f32
    %113 = vector.broadcast %cst_60 : f32 to vector<8x512xf32>
    %114 = arith.maximumf %112, %113 : vector<8x512xf32>
    %c0_61 = arith.constant 0 : index
    %c0_62 = arith.constant 0 : index
    %115 = vector.load %arg10[%c0_61, %c0_62] : memref<8x512xf32, #tpu.memory_space<vmem>>, vector<8x512xf32>
    tpu.vector_store %arg10[%c0_61, %c0_62], %114 {strides = array<i32>} : memref<8x512xf32, #tpu.memory_space<vmem>>, vector<8x512xf32>,
    %c0_63 = arith.constant 0 : index
    %c17_64 = arith.constant 17 : index
    %116 = vector.load %arg13[%c0_63, %c17_64] : memref<16x546xf32, #tpu.memory_space<vmem>>, vector<8x512xf32>
    tpu.vector_store %arg13[%c0_63, %c17_64], %114 {strides = array<i32>} : memref<16x546xf32, #tpu.memory_space<vmem>>, vector<8x512xf32>,
    %117 = tpu.iota {dimensions = array<i32: 1>} : vector<1x512xi32>
    %c15_i32_65 = arith.constant 15 : i32
    %118 = vector.broadcast %c15_i32_65 : i32 to vector<1x512xi32>
    %119 = arith.andi %117, %118 : vector<1x512xi32>
    %c4_i32_66 = arith.constant 4 : i32
    %120 = vector.broadcast %c4_i32_66 : i32 to vector<1x512xi32>
    %121 = arith.shrsi %117, %120 : vector<1x512xi32>
    %c15_i32_67 = arith.constant 15 : i32
    %122 = vector.broadcast %c15_i32_67 : i32 to vector<1x512xi32>
    %123 = arith.andi %121, %122 : vector<1x512xi32>
    %c0_68 = arith.constant 0 : index
    %c0_69 = arith.constant 0 : index
    %124 = vector.load %arg13[%c0_68, %c0_69] : memref<16x546xf32, #tpu.memory_space<vmem>>, vector<8x512xf32>
    %c1_i32_70 = arith.constant 1 : i32
    %125 = vector.broadcast %c1_i32_70 : i32 to vector<1x512xi32>
    %126 = arith.cmpi sge, %123, %125 : vector<1x512xi32>
    %c1_i32_71 = arith.constant 1 : i32
    %127 = vector.broadcast %c1_i32_71 : i32 to vector<1x512xi32>
    %128 = arith.cmpi sge, %119, %127 : vector<1x512xi32>
    %129 = arith.andi %126, %128 : vector<1x512xi1>
    %cst_72 = arith.constant 0.000000e+00 : f32
    %130 = vector.shape_cast %129 : vector<1x512xi1> to vector<1x512xi1>
    %131 = vector.broadcast %130 : vector<1x512xi1> to vector<8x512xi1>
    %132 = vector.broadcast %cst_72 : f32 to vector<8x512xf32>
    %133 = arith.select %131, %124, %132 : vector<8x512xi1>, vector<8x512xf32>
    %c0_73 = arith.constant 0 : index
    %c0_74 = arith.constant 0 : index
    %134 = vector.load %arg14[%c0_73, %c0_74] : memref<144x512xf32, #tpu.memory_space<vmem>>, vector<8x512xf32>
    tpu.vector_store %arg14[%c0_73, %c0_74], %133 {strides = array<i32>} : memref<144x512xf32, #tpu.memory_space<vmem>>, vector<8x512xf32>,
    %c0_75 = arith.constant 0 : index
    %c1_76 = arith.constant 1 : index
    %135 = vector.load %arg13[%c0_75, %c1_76] : memref<16x546xf32, #tpu.memory_space<vmem>>, vector<8x512xf32>
    %c1_i32_77 = arith.constant 1 : i32
    %136 = vector.broadcast %c1_i32_77 : i32 to vector<1x512xi32>
    %137 = arith.cmpi sge, %123, %136 : vector<1x512xi32>
    %cst_78 = arith.constant 0.000000e+00 : f32
    %138 = vector.shape_cast %137 : vector<1x512xi1> to vector<1x512xi1>
    %139 = vector.broadcast %138 : vector<1x512xi1> to vector<8x512xi1>
    %140 = vector.broadcast %cst_78 : f32 to vector<8x512xf32>
    %141 = arith.select %139, %135, %140 : vector<8x512xi1>, vector<8x512xf32>
    %c8 = arith.constant 8 : index
    %c0_79 = arith.constant 0 : index
    %142 = vector.load %arg14[%c8, %c0_79] : memref<144x512xf32, #tpu.memory_space<vmem>>, vector<8x512xf32>
    tpu.vector_store %arg14[%c8, %c0_79], %141 {strides = array<i32>} : memref<144x512xf32, #tpu.memory_space<vmem>>, vector<8x512xf32>,
    %c0_80 = arith.constant 0 : index
    %c2_81 = arith.constant 2 : index
    %143 = vector.load %arg13[%c0_80, %c2_81] : memref<16x546xf32, #tpu.memory_space<vmem>>, vector<8x512xf32>
    %c1_i32_82 = arith.constant 1 : i32
    %144 = vector.broadcast %c1_i32_82 : i32 to vector<1x512xi32>
    %145 = arith.cmpi sge, %123, %144 : vector<1x512xi32>
    %c15_i32_83 = arith.constant 15 : i32
    %146 = vector.broadcast %c15_i32_83 : i32 to vector<1x512xi32>
    %147 = arith.cmpi slt, %119, %146 : vector<1x512xi32>
    %148 = arith.andi %145, %147 : vector<1x512xi1>
    %cst_84 = arith.constant 0.000000e+00 : f32
    %149 = vector.shape_cast %148 : vector<1x512xi1> to vector<1x512xi1>
    %150 = vector.broadcast %149 : vector<1x512xi1> to vector<8x512xi1>
    %151 = vector.broadcast %cst_84 : f32 to vector<8x512xf32>
    %152 = arith.select %150, %143, %151 : vector<8x512xi1>, vector<8x512xf32>
    %c16_85 = arith.constant 16 : index
    %c0_86 = arith.constant 0 : index
    %153 = vector.load %arg14[%c16_85, %c0_86] : memref<144x512xf32, #tpu.memory_space<vmem>>, vector<8x512xf32>
    tpu.vector_store %arg14[%c16_85, %c0_86], %152 {strides = array<i32>} : memref<144x512xf32, #tpu.memory_space<vmem>>, vector<8x512xf32>,
    %c0_87 = arith.constant 0 : index
    %c16_88 = arith.constant 16 : index
    %154 = vector.load %arg13[%c0_87, %c16_88] : memref<16x546xf32, #tpu.memory_space<vmem>>, vector<8x512xf32>
    %c1_i32_89 = arith.constant 1 : i32
    %155 = vector.broadcast %c1_i32_89 : i32 to vector<1x512xi32>
    %156 = arith.cmpi sge, %119, %155 : vector<1x512xi32>
    %cst_90 = arith.constant 0.000000e+00 : f32
    %157 = vector.shape_cast %156 : vector<1x512xi1> to vector<1x512xi1>
    %158 = vector.broadcast %157 : vector<1x512xi1> to vector<8x512xi1>
    %159 = vector.broadcast %cst_90 : f32 to vector<8x512xf32>
    %160 = arith.select %158, %154, %159 : vector<8x512xi1>, vector<8x512xf32>
    %c24_91 = arith.constant 24 : index
    %c0_92 = arith.constant 0 : index
    %161 = vector.load %arg14[%c24_91, %c0_92] : memref<144x512xf32, #tpu.memory_space<vmem>>, vector<8x512xf32>
    tpu.vector_store %arg14[%c24_91, %c0_92], %160 {strides = array<i32>} : memref<144x512xf32, #tpu.memory_space<vmem>>, vector<8x512xf32>,
    %c0_93 = arith.constant 0 : index
    %c17_94 = arith.constant 17 : index
    %162 = vector.load %arg13[%c0_93, %c17_94] : memref<16x546xf32, #tpu.memory_space<vmem>>, vector<8x512xf32>
    %c32_95 = arith.constant 32 : index
    %c0_96 = arith.constant 0 : index
    %163 = vector.load %arg14[%c32_95, %c0_96] : memref<144x512xf32, #tpu.memory_space<vmem>>, vector<8x512xf32>
    tpu.vector_store %arg14[%c32_95, %c0_96], %162 {strides = array<i32>} : memref<144x512xf32, #tpu.memory_space<vmem>>, vector<8x512xf32>,
    %c0_97 = arith.constant 0 : index
    %c18_98 = arith.constant 18 : index
    %164 = vector.load %arg13[%c0_97, %c18_98] : memref<16x546xf32, #tpu.memory_space<vmem>>, vector<8x512xf32>
    %c15_i32_99 = arith.constant 15 : i32
    %165 = vector.broadcast %c15_i32_99 : i32 to vector<1x512xi32>
    %166 = arith.cmpi slt, %119, %165 : vector<1x512xi32>
    %cst_100 = arith.constant 0.000000e+00 : f32
    %167 = vector.shape_cast %166 : vector<1x512xi1> to vector<1x512xi1>
    %168 = vector.broadcast %167 : vector<1x512xi1> to vector<8x512xi1>
    %169 = vector.broadcast %cst_100 : f32 to vector<8x512xf32>
    %170 = arith.select %168, %164, %169 : vector<8x512xi1>, vector<8x512xf32>
    %c40 = arith.constant 40 : index
    %c0_101 = arith.constant 0 : index
    %171 = vector.load %arg14[%c40, %c0_101] : memref<144x512xf32, #tpu.memory_space<vmem>>, vector<8x512xf32>
    tpu.vector_store %arg14[%c40, %c0_101], %170 {strides = array<i32>} : memref<144x512xf32, #tpu.memory_space<vmem>>, vector<8x512xf32>,
    %c0_102 = arith.constant 0 : index
    %c32_103 = arith.constant 32 : index
    %172 = vector.load %arg13[%c0_102, %c32_103] : memref<16x546xf32, #tpu.memory_space<vmem>>, vector<8x512xf32>
    %c15_i32_104 = arith.constant 15 : i32
    %173 = vector.broadcast %c15_i32_104 : i32 to vector<1x512xi32>
    %174 = arith.cmpi slt, %123, %173 : vector<1x512xi32>
    %c1_i32_105 = arith.constant 1 : i32
    %175 = vector.broadcast %c1_i32_105 : i32 to vector<1x512xi32>
    %176 = arith.cmpi sge, %119, %175 : vector<1x512xi32>
    %177 = arith.andi %174, %176 : vector<1x512xi1>
    %cst_106 = arith.constant 0.000000e+00 : f32
    %178 = vector.shape_cast %177 : vector<1x512xi1> to vector<1x512xi1>
    %179 = vector.broadcast %178 : vector<1x512xi1> to vector<8x512xi1>
    %180 = vector.broadcast %cst_106 : f32 to vector<8x512xf32>
    %181 = arith.select %179, %172, %180 : vector<8x512xi1>, vector<8x512xf32>
    %c48 = arith.constant 48 : index
    %c0_107 = arith.constant 0 : index
    %182 = vector.load %arg14[%c48, %c0_107] : memref<144x512xf32, #tpu.memory_space<vmem>>, vector<8x512xf32>
    tpu.vector_store %arg14[%c48, %c0_107], %181 {strides = array<i32>} : memref<144x512xf32, #tpu.memory_space<vmem>>, vector<8x512xf32>,
    %c0_108 = arith.constant 0 : index
    %c33_109 = arith.constant 33 : index
    %183 = vector.load %arg13[%c0_108, %c33_109] : memref<16x546xf32, #tpu.memory_space<vmem>>, vector<8x512xf32>
    %c15_i32_110 = arith.constant 15 : i32
    %184 = vector.broadcast %c15_i32_110 : i32 to vector<1x512xi32>
    %185 = arith.cmpi slt, %123, %184 : vector<1x512xi32>
    %cst_111 = arith.constant 0.000000e+00 : f32
    %186 = vector.shape_cast %185 : vector<1x512xi1> to vector<1x512xi1>
    %187 = vector.broadcast %186 : vector<1x512xi1> to vector<8x512xi1>
    %188 = vector.broadcast %cst_111 : f32 to vector<8x512xf32>
    %189 = arith.select %187, %183, %188 : vector<8x512xi1>, vector<8x512xf32>
    %c56 = arith.constant 56 : index
    %c0_112 = arith.constant 0 : index
    %190 = vector.load %arg14[%c56, %c0_112] : memref<144x512xf32, #tpu.memory_space<vmem>>, vector<8x512xf32>
    tpu.vector_store %arg14[%c56, %c0_112], %189 {strides = array<i32>} : memref<144x512xf32, #tpu.memory_space<vmem>>, vector<8x512xf32>,
    %c0_113 = arith.constant 0 : index
    %c34_114 = arith.constant 34 : index
    %191 = vector.load %arg13[%c0_113, %c34_114] : memref<16x546xf32, #tpu.memory_space<vmem>>, vector<8x512xf32>
    %c15_i32_115 = arith.constant 15 : i32
    %192 = vector.broadcast %c15_i32_115 : i32 to vector<1x512xi32>
    %193 = arith.cmpi slt, %123, %192 : vector<1x512xi32>
    %c15_i32_116 = arith.constant 15 : i32
    %194 = vector.broadcast %c15_i32_116 : i32 to vector<1x512xi32>
    %195 = arith.cmpi slt, %119, %194 : vector<1x512xi32>
    %196 = arith.andi %193, %195 : vector<1x512xi1>
    %cst_117 = arith.constant 0.000000e+00 : f32
    %197 = vector.shape_cast %196 : vector<1x512xi1> to vector<1x512xi1>
    %198 = vector.broadcast %197 : vector<1x512xi1> to vector<8x512xi1>
    %199 = vector.broadcast %cst_117 : f32 to vector<8x512xf32>
    %200 = arith.select %198, %191, %199 : vector<8x512xi1>, vector<8x512xf32>
    %c64 = arith.constant 64 : index
    %c0_118 = arith.constant 0 : index
    %201 = vector.load %arg14[%c64, %c0_118] : memref<144x512xf32, #tpu.memory_space<vmem>>, vector<8x512xf32>
    tpu.vector_store %arg14[%c64, %c0_118], %200 {strides = array<i32>} : memref<144x512xf32, #tpu.memory_space<vmem>>, vector<8x512xf32>,
    %c0_119 = arith.constant 0 : index
    %c0_120 = arith.constant 0 : index
    %202 = vector.load %arg3[%c0_119, %c0_120] : memref<16x72xf32, #tpu.memory_space<vmem>>, vector<16x72xf32>
    %c0_121 = arith.constant 0 : index
    %c0_122 = arith.constant 0 : index
    %203 = vector.load %arg14[%c0_121, %c0_122] : memref<144x512xf32, #tpu.memory_space<vmem>>, vector<72x512xf32>
    %cst_123 = arith.constant dense<0.000000e+00> : vector<16x512xf32>
    %204 = tpu.matmul %202, %203, %cst_123 {dimension_numbers = #tpu.dot_dimension_numbers<[1], [0], [0], [1], [0, 0, 1, 1], [], []>} : vector<16x72xf32>, vector<72x512xf32>, vector<16x512xf32> -> vector<16x512xf32>
    %c0_124 = arith.constant 0 : index
    %c0_125 = arith.constant 0 : index
    %205 = vector.load %arg8[%c0_124, %c0_125] : memref<512x128xf32, #tpu.memory_space<vmem>>, vector<512x128xf32>
    %cst_126 = arith.constant dense<0.000000e+00> : vector<16x128xf32>
    %206 = tpu.matmul %204, %205, %cst_126 {dimension_numbers = #tpu.dot_dimension_numbers<[1], [0], [0], [1], [0, 0, 1, 1], [], []>} : vector<16x512xf32>, vector<512x128xf32>, vector<16x128xf32> -> vector<16x128xf32>
    %cst_127 = arith.constant dense<0.000000e+00> : vector<16xf32>
    %207 = vector.multi_reduction <add>, %206, %cst_127 [1] : vector<16x128xf32> to vector<16xf32>
    %208 = vector.shape_cast %207 : vector<16xf32> to vector<16x1xf32>
    %cst_128 = arith.constant 7.812500e-03 : f32
    %209 = vector.broadcast %cst_128 : f32 to vector<16x1xf32>
    %210 = arith.mulf %208, %209 : vector<16x1xf32>
    %211 = vector.broadcast %210 : vector<16x1xf32> to vector<16x128xf32>
    %212 = arith.subf %206, %211 : vector<16x128xf32>
    %213 = arith.mulf %212, %212 : vector<16x128xf32>
    %cst_129 = arith.constant dense<0.000000e+00> : vector<16xf32>
    %214 = vector.multi_reduction <add>, %213, %cst_129 [1] : vector<16x128xf32> to vector<16xf32>
    %215 = vector.shape_cast %214 : vector<16xf32> to vector<16x1xf32>
    %cst_130 = arith.constant 7.812500e-03 : f32
    %216 = vector.broadcast %cst_130 : f32 to vector<16x1xf32>
    %217 = arith.mulf %215, %216 : vector<16x1xf32>
    %c0_131 = arith.constant 0 : index
    %c0_132 = arith.constant 0 : index
    %218 = vector.load %arg6[%c0_131, %c0_132] : memref<16x2xf32, #tpu.memory_space<vmem>>, vector<16x1xf32>
    %c0_133 = arith.constant 0 : index
    %c1_134 = arith.constant 1 : index
    %219 = vector.load %arg6[%c0_133, %c1_134] : memref<16x2xf32, #tpu.memory_space<vmem>>, vector<16x1xf32>
    %cst_135 = arith.constant 9.99999974E-6 : f32
    %220 = vector.broadcast %cst_135 : f32 to vector<16x1xf32>
    %221 = arith.addf %217, %220 : vector<16x1xf32>
    %222 = math.rsqrt %221 : vector<16x1xf32>
    %223 = arith.mulf %218, %222 : vector<16x1xf32>
    %224 = vector.broadcast %223 : vector<16x1xf32> to vector<16x128xf32>
    %225 = arith.mulf %212, %224 : vector<16x128xf32>
    %226 = vector.broadcast %219 : vector<16x1xf32> to vector<16x128xf32>
    %227 = arith.addf %225, %226 : vector<16x128xf32>
    %cst_136 = arith.constant 0.000000e+00 : f32
    %228 = vector.broadcast %cst_136 : f32 to vector<16x128xf32>
    %229 = arith.maximumf %227, %228 : vector<16x128xf32>
    %c0_137 = arith.constant 0 : index
    %c0_138 = arith.constant 0 : index
    %230 = vector.load %arg11[%c0_137, %c0_138] : memref<16x128xf32, #tpu.memory_space<vmem>>, vector<16x128xf32>
    tpu.vector_store %arg11[%c0_137, %c0_138], %229 {strides = array<i32>} : memref<16x128xf32, #tpu.memory_space<vmem>>, vector<16x128xf32>,
    %c0_139 = arith.constant 0 : index
    %c17_140 = arith.constant 17 : index
    %231 = vector.load %arg13[%c0_139, %c17_140] : memref<16x546xf32, #tpu.memory_space<vmem>>, vector<16x128xf32>
    tpu.vector_store %arg13[%c0_139, %c17_140], %229 {strides = array<i32>} : memref<16x546xf32, #tpu.memory_space<vmem>>, vector<16x128xf32>,
    %232 = tpu.iota {dimensions = array<i32: 1>} : vector<1x128xi32>
    %c7_i32 = arith.constant 7 : i32
    %233 = vector.broadcast %c7_i32 : i32 to vector<1x128xi32>
    %234 = arith.andi %232, %233 : vector<1x128xi32>
    %c3_i32 = arith.constant 3 : i32
    %235 = vector.broadcast %c3_i32 : i32 to vector<1x128xi32>
    %236 = arith.shrsi %232, %235 : vector<1x128xi32>
    %c7_i32_141 = arith.constant 7 : i32
    %237 = vector.broadcast %c7_i32_141 : i32 to vector<1x128xi32>
    %238 = arith.andi %236, %237 : vector<1x128xi32>
    %c0_142 = arith.constant 0 : index
    %c8_143 = arith.constant 8 : index
    %239 = vector.load %arg13[%c0_142, %c8_143] : memref<16x546xf32, #tpu.memory_space<vmem>>, vector<16x128xf32>
    %c1_i32_144 = arith.constant 1 : i32
    %240 = vector.broadcast %c1_i32_144 : i32 to vector<1x128xi32>
    %241 = arith.cmpi sge, %238, %240 : vector<1x128xi32>
    %c1_i32_145 = arith.constant 1 : i32
    %242 = vector.broadcast %c1_i32_145 : i32 to vector<1x128xi32>
    %243 = arith.cmpi sge, %234, %242 : vector<1x128xi32>
    %244 = arith.andi %241, %243 : vector<1x128xi1>
    %cst_146 = arith.constant 0.000000e+00 : f32
    %245 = vector.shape_cast %244 : vector<1x128xi1> to vector<1x128xi1>
    %246 = vector.broadcast %245 : vector<1x128xi1> to vector<16x128xi1>
    %247 = vector.broadcast %cst_146 : f32 to vector<16x128xf32>
    %248 = arith.select %246, %239, %247 : vector<16x128xi1>, vector<16x128xf32>
    %c0_147 = arith.constant 0 : index
    %c0_148 = arith.constant 0 : index
    %249 = vector.load %arg14[%c0_147, %c0_148] : memref<144x512xf32, #tpu.memory_space<vmem>>, vector<16x128xf32>
    tpu.vector_store %arg14[%c0_147, %c0_148], %248 {strides = array<i32>} : memref<144x512xf32, #tpu.memory_space<vmem>>, vector<16x128xf32>,
    %c0_149 = arith.constant 0 : index
    %c9_150 = arith.constant 9 : index
    %250 = vector.load %arg13[%c0_149, %c9_150] : memref<16x546xf32, #tpu.memory_space<vmem>>, vector<16x128xf32>
    %c1_i32_151 = arith.constant 1 : i32
    %251 = vector.broadcast %c1_i32_151 : i32 to vector<1x128xi32>
    %252 = arith.cmpi sge, %238, %251 : vector<1x128xi32>
    %cst_152 = arith.constant 0.000000e+00 : f32
    %253 = vector.shape_cast %252 : vector<1x128xi1> to vector<1x128xi1>
    %254 = vector.broadcast %253 : vector<1x128xi1> to vector<16x128xi1>
    %255 = vector.broadcast %cst_152 : f32 to vector<16x128xf32>
    %256 = arith.select %254, %250, %255 : vector<16x128xi1>, vector<16x128xf32>
    %c16_153 = arith.constant 16 : index
    %c0_154 = arith.constant 0 : index
    %257 = vector.load %arg14[%c16_153, %c0_154] : memref<144x512xf32, #tpu.memory_space<vmem>>, vector<16x128xf32>
    tpu.vector_store %arg14[%c16_153, %c0_154], %256 {strides = array<i32>} : memref<144x512xf32, #tpu.memory_space<vmem>>, vector<16x128xf32>,
    %c0_155 = arith.constant 0 : index
    %c10 = arith.constant 10 : index
    %258 = vector.load %arg13[%c0_155, %c10] : memref<16x546xf32, #tpu.memory_space<vmem>>, vector<16x128xf32>
    %c1_i32_156 = arith.constant 1 : i32
    %259 = vector.broadcast %c1_i32_156 : i32 to vector<1x128xi32>
    %260 = arith.cmpi sge, %238, %259 : vector<1x128xi32>
    %c7_i32_157 = arith.constant 7 : i32
    %261 = vector.broadcast %c7_i32_157 : i32 to vector<1x128xi32>
    %262 = arith.cmpi slt, %234, %261 : vector<1x128xi32>
    %263 = arith.andi %260, %262 : vector<1x128xi1>
    %cst_158 = arith.constant 0.000000e+00 : f32
    %264 = vector.shape_cast %263 : vector<1x128xi1> to vector<1x128xi1>
    %265 = vector.broadcast %264 : vector<1x128xi1> to vector<16x128xi1>
    %266 = vector.broadcast %cst_158 : f32 to vector<16x128xf32>
    %267 = arith.select %265, %258, %266 : vector<16x128xi1>, vector<16x128xf32>
    %c32_159 = arith.constant 32 : index
    %c0_160 = arith.constant 0 : index
    %268 = vector.load %arg14[%c32_159, %c0_160] : memref<144x512xf32, #tpu.memory_space<vmem>>, vector<16x128xf32>
    tpu.vector_store %arg14[%c32_159, %c0_160], %267 {strides = array<i32>} : memref<144x512xf32, #tpu.memory_space<vmem>>, vector<16x128xf32>,
    %c0_161 = arith.constant 0 : index
    %c16_162 = arith.constant 16 : index
    %269 = vector.load %arg13[%c0_161, %c16_162] : memref<16x546xf32, #tpu.memory_space<vmem>>, vector<16x128xf32>
    %c1_i32_163 = arith.constant 1 : i32
    %270 = vector.broadcast %c1_i32_163 : i32 to vector<1x128xi32>
    %271 = arith.cmpi sge, %234, %270 : vector<1x128xi32>
    %cst_164 = arith.constant 0.000000e+00 : f32
    %272 = vector.shape_cast %271 : vector<1x128xi1> to vector<1x128xi1>
    %273 = vector.broadcast %272 : vector<1x128xi1> to vector<16x128xi1>
    %274 = vector.broadcast %cst_164 : f32 to vector<16x128xf32>
    %275 = arith.select %273, %269, %274 : vector<16x128xi1>, vector<16x128xf32>
    %c48_165 = arith.constant 48 : index
    %c0_166 = arith.constant 0 : index
    %276 = vector.load %arg14[%c48_165, %c0_166] : memref<144x512xf32, #tpu.memory_space<vmem>>, vector<16x128xf32>
    tpu.vector_store %arg14[%c48_165, %c0_166], %275 {strides = array<i32>} : memref<144x512xf32, #tpu.memory_space<vmem>>, vector<16x128xf32>,
    %c0_167 = arith.constant 0 : index
    %c17_168 = arith.constant 17 : index
    %277 = vector.load %arg13[%c0_167, %c17_168] : memref<16x546xf32, #tpu.memory_space<vmem>>, vector<16x128xf32>
    %c64_169 = arith.constant 64 : index
    %c0_170 = arith.constant 0 : index
    %278 = vector.load %arg14[%c64_169, %c0_170] : memref<144x512xf32, #tpu.memory_space<vmem>>, vector<16x128xf32>
    tpu.vector_store %arg14[%c64_169, %c0_170], %277 {strides = array<i32>} : memref<144x512xf32, #tpu.memory_space<vmem>>, vector<16x128xf32>,
    %c0_171 = arith.constant 0 : index
    %c18_172 = arith.constant 18 : index
    %279 = vector.load %arg13[%c0_171, %c18_172] : memref<16x546xf32, #tpu.memory_space<vmem>>, vector<16x128xf32>
    %c7_i32_173 = arith.constant 7 : i32
    %280 = vector.broadcast %c7_i32_173 : i32 to vector<1x128xi32>
    %281 = arith.cmpi slt, %234, %280 : vector<1x128xi32>
    %cst_174 = arith.constant 0.000000e+00 : f32
    %282 = vector.shape_cast %281 : vector<1x128xi1> to vector<1x128xi1>
    %283 = vector.broadcast %282 : vector<1x128xi1> to vector<16x128xi1>
    %284 = vector.broadcast %cst_174 : f32 to vector<16x128xf32>
    %285 = arith.select %283, %279, %284 : vector<16x128xi1>, vector<16x128xf32>
    %c80 = arith.constant 80 : index
    %c0_175 = arith.constant 0 : index
    %286 = vector.load %arg14[%c80, %c0_175] : memref<144x512xf32, #tpu.memory_space<vmem>>, vector<16x128xf32>
    tpu.vector_store %arg14[%c80, %c0_175], %285 {strides = array<i32>} : memref<144x512xf32, #tpu.memory_space<vmem>>, vector<16x128xf32>,
    %c0_176 = arith.constant 0 : index
    %c24_177 = arith.constant 24 : index
    %287 = vector.load %arg13[%c0_176, %c24_177] : memref<16x546xf32, #tpu.memory_space<vmem>>, vector<16x128xf32>
    %c7_i32_178 = arith.constant 7 : i32
    %288 = vector.broadcast %c7_i32_178 : i32 to vector<1x128xi32>
    %289 = arith.cmpi slt, %238, %288 : vector<1x128xi32>
    %c1_i32_179 = arith.constant 1 : i32
    %290 = vector.broadcast %c1_i32_179 : i32 to vector<1x128xi32>
    %291 = arith.cmpi sge, %234, %290 : vector<1x128xi32>
    %292 = arith.andi %289, %291 : vector<1x128xi1>
    %cst_180 = arith.constant 0.000000e+00 : f32
    %293 = vector.shape_cast %292 : vector<1x128xi1> to vector<1x128xi1>
    %294 = vector.broadcast %293 : vector<1x128xi1> to vector<16x128xi1>
    %295 = vector.broadcast %cst_180 : f32 to vector<16x128xf32>
    %296 = arith.select %294, %287, %295 : vector<16x128xi1>, vector<16x128xf32>
    %c96 = arith.constant 96 : index
    %c0_181 = arith.constant 0 : index
    %297 = vector.load %arg14[%c96, %c0_181] : memref<144x512xf32, #tpu.memory_space<vmem>>, vector<16x128xf32>
    tpu.vector_store %arg14[%c96, %c0_181], %296 {strides = array<i32>} : memref<144x512xf32, #tpu.memory_space<vmem>>, vector<16x128xf32>,
    %c0_182 = arith.constant 0 : index
    %c25 = arith.constant 25 : index
    %298 = vector.load %arg13[%c0_182, %c25] : memref<16x546xf32, #tpu.memory_space<vmem>>, vector<16x128xf32>
    %c7_i32_183 = arith.constant 7 : i32
    %299 = vector.broadcast %c7_i32_183 : i32 to vector<1x128xi32>
    %300 = arith.cmpi slt, %238, %299 : vector<1x128xi32>
    %cst_184 = arith.constant 0.000000e+00 : f32
    %301 = vector.shape_cast %300 : vector<1x128xi1> to vector<1x128xi1>
    %302 = vector.broadcast %301 : vector<1x128xi1> to vector<16x128xi1>
    %303 = vector.broadcast %cst_184 : f32 to vector<16x128xf32>
    %304 = arith.select %302, %298, %303 : vector<16x128xi1>, vector<16x128xf32>
    %c112 = arith.constant 112 : index
    %c0_185 = arith.constant 0 : index
    %305 = vector.load %arg14[%c112, %c0_185] : memref<144x512xf32, #tpu.memory_space<vmem>>, vector<16x128xf32>
    tpu.vector_store %arg14[%c112, %c0_185], %304 {strides = array<i32>} : memref<144x512xf32, #tpu.memory_space<vmem>>, vector<16x128xf32>,
    %c0_186 = arith.constant 0 : index
    %c26 = arith.constant 26 : index
    %306 = vector.load %arg13[%c0_186, %c26] : memref<16x546xf32, #tpu.memory_space<vmem>>, vector<16x128xf32>
    %c7_i32_187 = arith.constant 7 : i32
    %307 = vector.broadcast %c7_i32_187 : i32 to vector<1x128xi32>
    %308 = arith.cmpi slt, %238, %307 : vector<1x128xi32>
    %c7_i32_188 = arith.constant 7 : i32
    %309 = vector.broadcast %c7_i32_188 : i32 to vector<1x128xi32>
    %310 = arith.cmpi slt, %234, %309 : vector<1x128xi32>
    %311 = arith.andi %308, %310 : vector<1x128xi1>
    %cst_189 = arith.constant 0.000000e+00 : f32
    %312 = vector.shape_cast %311 : vector<1x128xi1> to vector<1x128xi1>
    %313 = vector.broadcast %312 : vector<1x128xi1> to vector<16x128xi1>
    %314 = vector.broadcast %cst_189 : f32 to vector<16x128xf32>
    %315 = arith.select %313, %306, %314 : vector<16x128xi1>, vector<16x128xf32>
    %c128 = arith.constant 128 : index
    %c0_190 = arith.constant 0 : index
    %316 = vector.load %arg14[%c128, %c0_190] : memref<144x512xf32, #tpu.memory_space<vmem>>, vector<16x128xf32>
    tpu.vector_store %arg14[%c128, %c0_190], %315 {strides = array<i32>} : memref<144x512xf32, #tpu.memory_space<vmem>>, vector<16x128xf32>,
    %c0_191 = arith.constant 0 : index
    %c0_192 = arith.constant 0 : index
    %317 = vector.load %arg4[%c0_191, %c0_192] : memref<32x144xf32, #tpu.memory_space<vmem>>, vector<32x144xf32>
    %c0_193 = arith.constant 0 : index
    %c0_194 = arith.constant 0 : index
    %318 = vector.load %arg14[%c0_193, %c0_194] : memref<144x512xf32, #tpu.memory_space<vmem>>, vector<144x128xf32>
    %cst_195 = arith.constant dense<0.000000e+00> : vector<32x128xf32>
    %319 = tpu.matmul %317, %318, %cst_195 {dimension_numbers = #tpu.dot_dimension_numbers<[1], [0], [0], [1], [0, 0, 1, 1], [], []>} : vector<32x144xf32>, vector<144x128xf32>, vector<32x128xf32> -> vector<32x128xf32>
    %c0_196 = arith.constant 0 : index
    %c0_197 = arith.constant 0 : index
    %320 = vector.load %arg9[%c0_196, %c0_197] : memref<128x32xf32, #tpu.memory_space<vmem>>, vector<128x32xf32>
    %cst_198 = arith.constant dense<0.000000e+00> : vector<32x32xf32>
    %321 = tpu.matmul %319, %320, %cst_198 {dimension_numbers = #tpu.dot_dimension_numbers<[1], [0], [0], [1], [0, 0, 1, 1], [], []>} : vector<32x128xf32>, vector<128x32xf32>, vector<32x32xf32> -> vector<32x32xf32>
    %cst_199 = arith.constant dense<0.000000e+00> : vector<32xf32>
    %322 = vector.multi_reduction <add>, %321, %cst_199 [1] : vector<32x32xf32> to vector<32xf32>
    %323 = vector.shape_cast %322 : vector<32xf32> to vector<32x1xf32>
    %cst_200 = arith.constant 3.125000e-02 : f32
    %324 = vector.broadcast %cst_200 : f32 to vector<32x1xf32>
    %325 = arith.mulf %323, %324 : vector<32x1xf32>
    %326 = vector.broadcast %325 : vector<32x1xf32> to vector<32x32xf32>
    %327 = arith.subf %321, %326 : vector<32x32xf32>
    %328 = arith.mulf %327, %327 : vector<32x32xf32>
    %cst_201 = arith.constant dense<0.000000e+00> : vector<32xf32>
    %329 = vector.multi_reduction <add>, %328, %cst_201 [1] : vector<32x32xf32> to vector<32xf32>
    %330 = vector.shape_cast %329 : vector<32xf32> to vector<32x1xf32>
    %cst_202 = arith.constant 3.125000e-02 : f32
    %331 = vector.broadcast %cst_202 : f32 to vector<32x1xf32>
    %332 = arith.mulf %330, %331 : vector<32x1xf32>
    %c0_203 = arith.constant 0 : index
    %c0_204 = arith.constant 0 : index
    %333 = vector.load %arg7[%c0_203, %c0_204] : memref<32x2xf32, #tpu.memory_space<vmem>>, vector<32x1xf32>
    %c0_205 = arith.constant 0 : index
    %c1_206 = arith.constant 1 : index
    %334 = vector.load %arg7[%c0_205, %c1_206] : memref<32x2xf32, #tpu.memory_space<vmem>>, vector<32x1xf32>
    %cst_207 = arith.constant 9.99999974E-6 : f32
    %335 = vector.broadcast %cst_207 : f32 to vector<32x1xf32>
    %336 = arith.addf %332, %335 : vector<32x1xf32>
    %337 = math.rsqrt %336 : vector<32x1xf32>
    %338 = arith.mulf %333, %337 : vector<32x1xf32>
    %339 = vector.broadcast %338 : vector<32x1xf32> to vector<32x32xf32>
    %340 = arith.mulf %327, %339 : vector<32x32xf32>
    %341 = vector.broadcast %334 : vector<32x1xf32> to vector<32x32xf32>
    %342 = arith.addf %340, %341 : vector<32x32xf32>
    %cst_208 = arith.constant 0.000000e+00 : f32
    %343 = vector.broadcast %cst_208 : f32 to vector<32x32xf32>
    %344 = arith.maximumf %342, %343 : vector<32x32xf32>
    %c0_209 = arith.constant 0 : index
    %c0_210 = arith.constant 0 : index
    %345 = vector.load %arg12[%c0_209, %c0_210] : memref<32x32xf32, #tpu.memory_space<vmem>>, vector<32x32xf32>
    tpu.vector_store %arg12[%c0_209, %c0_210], %344 {strides = array<i32>} : memref<32x32xf32, #tpu.memory_space<vmem>>, vector<32x32xf32>,
    return
  }
  func.func @transform_0(%arg0: i32) -> (i32, i32) {
    %c0_i32 = arith.constant 0 : i32
    %c0_i32_0 = arith.constant 0 : i32
    %c0_i32_1 = arith.constant 0 : i32
    return %c0_i32, %c0_i32_0 : i32, i32
  }
  func.func @transform_1(%arg0: i32) -> (i32, i32) {
    %c0_i32 = arith.constant 0 : i32
    %c0_i32_0 = arith.constant 0 : i32
    %c0_i32_1 = arith.constant 0 : i32
    return %c0_i32, %c0_i32_0 : i32, i32
  }
  func.func @transform_2(%arg0: i32) -> (i32, i32) {
    %c0_i32 = arith.constant 0 : i32
    %c0_i32_0 = arith.constant 0 : i32
    %c0_i32_1 = arith.constant 0 : i32
    return %c0_i32, %c0_i32_0 : i32, i32
  }
  func.func @transform_3(%arg0: i32) -> (i32, i32) {
    %c0_i32 = arith.constant 0 : i32
    %c0_i32_0 = arith.constant 0 : i32
    %c0_i32_1 = arith.constant 0 : i32
    return %c0_i32, %c0_i32_0 : i32, i32
  }
  func.func @transform_4(%arg0: i32) -> (i32, i32) {
    %c0_i32 = arith.constant 0 : i32
    %c0_i32_0 = arith.constant 0 : i32
    %c0_i32_1 = arith.constant 0 : i32
    return %c0_i32, %c0_i32_0 : i32, i32
  }
  func.func @transform_5(%arg0: i32) -> (i32, i32) {
    %c0_i32 = arith.constant 0 : i32
    %c0_i32_0 = arith.constant 0 : i32
    %c0_i32_1 = arith.constant 0 : i32
    return %c0_i32, %c0_i32_0 : i32, i32
  }
  func.func @transform_6(%arg0: i32) -> (i32, i32) {
    %c0_i32 = arith.constant 0 : i32
    %c0_i32_0 = arith.constant 0 : i32
    %c0_i32_1 = arith.constant 0 : i32
    return %c0_i32, %c0_i32_0 : i32, i32
  }
  func.func @transform_7(%arg0: i32) -> (i32, i32) {
    %c0_i32 = arith.constant 0 : i32
    %c0_i32_0 = arith.constant 0 : i32
    %c0_i32_1 = arith.constant 0 : i32
    return %c0_i32, %c0_i32_0 : i32, i32
  }
  func.func @transform_8(%arg0: i32) -> (i32, i32) {
    %c0_i32 = arith.constant 0 : i32
    %c0_i32_0 = arith.constant 0 : i32
    %c0_i32_1 = arith.constant 0 : i32
    return %c0_i32, %c0_i32_0 : i32, i32
  }
  func.func @transform_9(%arg0: i32) -> (i32, i32) {
    %c0_i32 = arith.constant 0 : i32
    %c0_i32_0 = arith.constant 0 : i32
    %c0_i32_1 = arith.constant 0 : i32
    return %c0_i32, %c0_i32_0 : i32, i32
  }
  func.func @transform_10(%arg0: i32) -> (i32, i32) {
    %c0_i32 = arith.constant 0 : i32
    %c0_i32_0 = arith.constant 0 : i32
    %c0_i32_1 = arith.constant 0 : i32
    return %c0_i32, %c0_i32_0 : i32, i32
  }
  func.func @transform_11(%arg0: i32) -> (i32, i32) {
    %c0_i32 = arith.constant 0 : i32
    %c0_i32_0 = arith.constant 0 : i32
    %c0_i32_1 = arith.constant 0 : i32
    return %c0_i32, %c0_i32_0 : i32, i32
  }
}

</mosaic_0001>

<llo_original>
// kernel: msdn_first_layer_forward.1
$region0: #{msdn_first_layer_forward.1}
  #allocation0 [shape = 'u32[]', space=smem, size = 0x4, offset = 0x4, fixed_abs, tag = 'smem constant byte address 0x4 - core index']
  #allocation1 [shape = 'u32[72,128]{1,0:T(1,128)}', space=vmem, size = 0x9000, scoped, tag = 'internal scratch']
  #allocation2 [shape = 'f32[16,546]{1,0:T(8,128)}', space=vmem, size = 0xa000, scoped, tag = 'scratch operand']
  #allocation3 [shape = 'f32[144,512]{1,0:T(8,128)}', space=vmem, size = 0x48000, scoped, tag = 'scratch operand']
  %s0 = inlined_call_operand.vmem [shape: f32[3,512], index: 0, kind: input, shape index: {}]
  %s1 = inlined_call_operand.vmem [shape: f32[8,27], index: 1, kind: input, shape index: {}]
  %s2 = inlined_call_operand.vmem [shape: f32[16,72], index: 2, kind: input, shape index: {}]
  %s3 = inlined_call_operand.vmem [shape: f32[32,144], index: 3, kind: input, shape index: {}]
  %s4 = inlined_call_operand.vmem [shape: f32[8,2], index: 4, kind: input, shape index: {}]
  %s5 = inlined_call_operand.vmem [shape: f32[16,2], index: 5, kind: input, shape index: {}]
  %s6 = inlined_call_operand.vmem [shape: f32[32,2], index: 6, kind: input, shape index: {}]
  %s7 = inlined_call_operand.hbm [shape: f32[512,128], index: 7, kind: input, shape index: {}]
  %s8 = inlined_call_operand.vmem [shape: f32[128,32], index: 8, kind: input, shape index: {}]
  %s9 = inlined_call_operand.vmem [shape: f32[8,512], index: 9, kind: output, shape index: {0}]
  %s10 = inlined_call_operand.vmem [shape: f32[16,128], index: 10, kind: output, shape index: {1}]
  %s11 = inlined_call_operand.vmem [shape: f32[32,32], index: 11, kind: output, shape index: {2}]
  %12 = xla_tuple %s9, %s10, %s11
  %s13 = sld [smem:[#allocation0]]
  $region66: #{msdn_first_layer_forward.1} parent=0
    _
  %s15 = ssub.s32 1, %s13
  %s16 = scalar_select 0, %s15, %s13
  $region1: #{msdn_first_layer_forward.1} parent=0
    #allocation4 [shape = 'u8[262144]{0}', space=vmem, size = 0x40000, scoped, tag = 'input window, operand 7, single buffered']
    #allocation5 [shape = 's32[1]{0}', space=sflag, size = 0x4, scoped, tag = 'scoped memory for msdn_first_layer_forward.1']
    %17 = vsyncpa [#allocation5], 0
    // Predicated region
    $region2: #{msdn_first_layer_forward.1} parent=1 // pred_check
      _
    $region3: #{msdn_first_layer_forward.1} parent=1 // pred_check_branch
      %19 = sbr.rel (0) target = $region5
    $region4: #{msdn_first_layer_forward.1} parent=1 // pred_region
      _
    $region5: #{msdn_first_layer_forward.1} parent=1 // pred_fallthru
      _
    // Predicated region
    $region6: #{msdn_first_layer_forward.1} parent=1 // pred_check
      _
    $region7: #{msdn_first_layer_forward.1} parent=1 // pred_check_branch
      %21 = sbr.rel (0) target = $region9
    $region8: #{msdn_first_layer_forward.1} parent=1 // pred_region
      _
    $region9: #{msdn_first_layer_forward.1} parent=1 // pred_fallthru
      _
    // Predicated region
    $region10: #{msdn_first_layer_forward.1} parent=1 // pred_check
      _
    $region11: #{msdn_first_layer_forward.1} parent=1 // pred_check_branch
      %23 = sbr.rel (0) target = $region13
    $region12: #{msdn_first_layer_forward.1} parent=1 // pred_region
      _
    $region13: #{msdn_first_layer_forward.1} parent=1 // pred_fallthru
      _
    // Predicated region
    $region14: #{msdn_first_layer_forward.1} parent=1 // pred_check
      _
    $region15: #{msdn_first_layer_forward.1} parent=1 // pred_check_branch
      %25 = sbr.rel (0) target = $region17
    $region16: #{msdn_first_layer_forward.1} parent=1 // pred_region
      _
    $region17: #{msdn_first_layer_forward.1} parent=1 // pred_fallthru
      _
    // Predicated region
    $region18: #{msdn_first_layer_forward.1} parent=1 // pred_check
      _
    $region19: #{msdn_first_layer_forward.1} parent=1 // pred_check_branch
      %27 = sbr.rel (0) target = $region21
    $region20: #{msdn_first_layer_forward.1} parent=1 // pred_region
      _
    $region21: #{msdn_first_layer_forward.1} parent=1 // pred_fallthru
      _
    // Predicated region
    $region22: #{msdn_first_layer_forward.1} parent=1 // pred_check
      _
    $region23: #{msdn_first_layer_forward.1} parent=1 // pred_check_branch
      %29 = sbr.rel (0) target = $region25
    $region24: #{msdn_first_layer_forward.1} parent=1 // pred_region
      _
    $region25: #{msdn_first_layer_forward.1} parent=1 // pred_fallthru
      _
    // Predicated region
    $region26: #{msdn_first_layer_forward.1} parent=1 // pred_check
      _
    $region27: #{msdn_first_layer_forward.1} parent=1 // pred_check_branch
      %31 = sbr.rel (0) target = $region29
    $region28: #{msdn_first_layer_forward.1} parent=1 // pred_region
      _
    $region29: #{msdn_first_layer_forward.1} parent=1 // pred_fallthru
      _
    // Predicated region
    $region30: #{msdn_first_layer_forward.1} parent=1 // pred_check
      _
    $region31: #{msdn_first_layer_forward.1} parent=1 // pred_check_branch
      %33 = sbr.rel (0) target = $region33
    $region32: #{msdn_first_layer_forward.1} parent=1 // pred_region
      %35 = vsyncadd [#allocation5], 0
      %s36 = sshll.u32 %s7, 4
      %s37 = int_to_ptr.hbm [resolvable:$true] %s36
      %s38 = sshll.u32 [#allocation4], 4
      %s39 = int_to_ptr.vmem [resolvable:$true] %s38
      %44 = dma.hbm_to_vmem [thread:$0]  %s37, 8192, %s39, [#allocation5], 128, 128, 8
    $region33: #{msdn_first_layer_forward.1} parent=1 // pred_fallthru
      _
    // Predicated region
    $region34: #{msdn_first_layer_forward.1} parent=1 // pred_check
      _
    $region35: #{msdn_first_layer_forward.1} parent=1 // pred_check_branch
      %46 = sbr.rel (0) target = $region37
    $region36: #{msdn_first_layer_forward.1} parent=1 // pred_region
      _
    $region37: #{msdn_first_layer_forward.1} parent=1 // pred_fallthru
      _
    // Predicated region
    $region38: #{msdn_first_layer_forward.1} parent=1 // pred_check
      _
    $region39: #{msdn_first_layer_forward.1} parent=1 // pred_check_branch
      %48 = sbr.rel (0) target = $region41
    $region40: #{msdn_first_layer_forward.1} parent=1 // pred_region
      %50 = dma.done [#allocation5], 8192
    $region41: #{msdn_first_layer_forward.1} parent=1 // pred_fallthru
      _
    %51 = vst [vmem:[#allocation2] sm:$0xff] 0.0
    %52 = vst [vmem:[#allocation2 + $0x8] sm:$0xff] 0.0
    %53 = vst [vmem:[#allocation2 + $0x10] sm:$0xff] 0.0
    %54 = vst [vmem:[#allocation2 + $0x18] sm:$0xff] 0.0
    %vm55 = vcmask 277504
    %56 = vst.msk [vmem:[#allocation2 + $0x20] sm:$0xff] %vm55, 0.0
    %57 = vst [vmem:[#allocation2 + $0x28] sm:$0xff] 0.0
    %58 = vst [vmem:[#allocation2 + $0x30] sm:$0xff] 0.0
    %59 = vst [vmem:[#allocation2 + $0x38] sm:$0xff] 0.0
    %60 = vst [vmem:[#allocation2 + $0x40] sm:$0xff] 0.0
    %61 = vst.msk [vmem:[#allocation2 + $0x48] sm:$0xff] %vm55, 0.0
    %v62 = vld [vmem:[%s0] sm:$0x77]
    %v63 = vld [vmem:[%s0 + $0x8] sm:$0x77]
    %66 = vst [vmem:[#allocation1] ss:$2 sm:$0xff] %v62
    %s67 = scalar_lea.vmem [#allocation1], 16
    %68 = vst [vmem:[%s67] ss:$2 sm:$0xff] %v63
    %v69 = vld.sshfl [vmem:[#allocation1] sm:$0xff pattern:$0x75316420]
    %v70 = vld.sshfl [vmem:[#allocation1 + $0x8] sm:$0xff pattern:$0x75316420]
    %v71 = vld.sshfl [vmem:[#allocation1 + $0x10] sm:$0xff pattern:$0x75316420]
    %v72 = vld.sshfl [vmem:[#allocation1 + $0x18] sm:$0xff pattern:$0x75316420]
    %73 = vrot.lane.b32.xlu0 %v69, 17
    %v74 = vpop.permute.xlu0 %73
    %75 = vrot.lane.b32.xlu0 %v70, 17
    %v76 = vpop.permute.xlu0 %75
    %77 = vrot.lane.b32.xlu0 %v71, 17
    %v78 = vpop.permute.xlu0 %77
    %79 = vrot.lane.b32.xlu0 %v72, 17
    %v80 = vpop.permute.xlu0 %79
    %vm81 = vcmask 138240
    %v82 = vsel %vm81, %v74, %v76
    %v83 = vsel %vm81, %v76, %v78
    %v84 = vsel %vm81, %v78, %v80
    %vm90 = vcmask 1042568
    %91 = vst.msk [vmem:[#allocation2] sm:$0x7] %vm90, %v74
    %92 = vst [vmem:[#allocation2 + $0x8] sm:$0x7] %v82
    %93 = vst [vmem:[#allocation2 + $0x10] sm:$0x7] %v83
    %94 = vst [vmem:[#allocation2 + $0x18] sm:$0x7] %v84
    %vm95 = vcmask 133120
    %96 = vst.msk [vmem:[#allocation2 + $0x20] sm:$0x7] %vm95, %v80
    %v97 = vlaneseq
    %v98 = vand.u32 %v97, 127
    %v99 = vadd.s32 %v98, 128
    %v100 = vadd.s32 %v98, 256
    %v101 = vadd.s32 %v98, 384
    %v102 = vand.u32 %v98, 15
    %v103 = vand.u32 %v99, 15
    %v104 = vand.u32 %v100, 15
    %v105 = vand.u32 %v101, 15
    %v106 = vshra.s32 %v98, 4
    %v107 = vshra.s32 %v99, 4
    %v108 = vshra.s32 %v100, 4
    %v109 = vshra.s32 %v101, 4
    %v110 = vand.u32 %v106, 15
    %v111 = vand.u32 %v107, 15
    %v112 = vand.u32 %v108, 15
    %v113 = vand.u32 %v109, 15
    %v114 = vld [vmem:[#allocation2] sm:$0x7]
    %v115 = vld [vmem:[#allocation2 + $0x8] sm:$0x7]
    %v116 = vld [vmem:[#allocation2 + $0x10] sm:$0x7]
    %v117 = vld [vmem:[#allocation2 + $0x18] sm:$0x7]
    %vm118 = vcmp.ge.s32.totalorder %v110, 1
    %vm119 = vcmp.ge.s32.totalorder %v111, 1
    %vm120 = vcmp.ge.s32.totalorder %v112, 1
    %vm121 = vcmp.ge.s32.totalorder %v113, 1
    %vm122 = vcmp.ge.s32.totalorder %v102, 1
    %vm123 = vcmp.ge.s32.totalorder %v103, 1
    %vm124 = vcmp.ge.s32.totalorder %v104, 1
    %vm125 = vcmp.ge.s32.totalorder %v105, 1
    %vm126 = vmand %vm118, %vm122
    %vm127 = vmand %vm119, %vm123
    %vm128 = vmand %vm120, %vm124
    %vm129 = vmand %vm121, %vm125
    %v130 = vsel %vm126, 1, 0
    %v131 = vsel %vm127, 1, 0
    %v132 = vsel %vm128, 1, 0
    %v133 = vsel %vm129, 1, 0
    %vm134 = vcmp.eq.s32.totalorder %v130, 1
    %vm135 = vcmp.eq.s32.totalorder %v131, 1
    %vm136 = vcmp.eq.s32.totalorder %v132, 1
    %vm137 = vcmp.eq.s32.totalorder %v133, 1
    %v138 = vsel %vm134, %v114, 0.0
    %v139 = vsel %vm135, %v115, 0.0
    %v140 = vsel %vm136, %v116, 0.0
    %v141 = vsel %vm137, %v117, 0.0
    %142 = vst [vmem:[#allocation3] sm:$0x7] %v138
    %143 = vst [vmem:[#allocation3 + $0x8] sm:$0x7] %v139
    %144 = vst [vmem:[#allocation3 + $0x10] sm:$0x7] %v140
    %145 = vst [vmem:[#allocation3 + $0x18] sm:$0x7] %v141
    %v146 = vld [vmem:[#allocation2] sm:$0x7]
    %v147 = vld [vmem:[#allocation2 + $0x8] sm:$0x7]
    %v148 = vld [vmem:[#allocation2 + $0x10] sm:$0x7]
    %v149 = vld [vmem:[#allocation2 + $0x18] sm:$0x7]
    %v150 = vld [vmem:[#allocation2 + $0x20] sm:$0x7]
    %v151 = vsel %vm118, 1, 0
    %v152 = vsel %vm119, 1, 0
    %v153 = vsel %vm120, 1, 0
    %v154 = vsel %vm121, 1, 0
    %vm155 = vcmp.eq.s32.totalorder %v151, 1
    %vm156 = vcmp.eq.s32.totalorder %v152, 1
    %vm157 = vcmp.eq.s32.totalorder %v153, 1
    %vm158 = vcmp.eq.s32.totalorder %v154, 1
    %164 = vrot.lane.b32.xlu0 %v146, 127
    %v165 = vpop.permute.xlu0 %164
    %166 = vrot.lane.b32.xlu0 %v147, 127
    %v167 = vpop.permute.xlu0 %166
    %168 = vrot.lane.b32.xlu0 %v148, 127
    %v169 = vpop.permute.xlu0 %168
    %170 = vrot.lane.b32.xlu0 %v149, 127
    %v171 = vpop.permute.xlu0 %170
    %172 = vrot.lane.b32.xlu0 %v150, 127
    %v173 = vpop.permute.xlu0 %172
    %vm174 = vcmask 1039360
    %v175 = vsel %vm174, %v165, %v167
    %v176 = vsel %vm174, %v167, %v169
    %v177 = vsel %vm174, %v169, %v171
    %v178 = vsel %vm174, %v171, %v173
    %v183 = vsel %vm155, %v175, 0.0
    %v184 = vsel %vm156, %v176, 0.0
    %v185 = vsel %vm157, %v177, 0.0
    %v186 = vsel %vm158, %v178, 0.0
    %v191 = vrot.slane %v183, 5
    %v192 = vrot.slane %v184, 5
    %v193 = vrot.slane %v185, 5
    %v194 = vrot.slane %v186, 5
    %199 = vst [vmem:[#allocation3] sm:$0x38] %v191
    %200 = vst [vmem:[#allocation3 + $0x8] sm:$0x38] %v192
    %201 = vst [vmem:[#allocation3 + $0x10] sm:$0x38] %v193
    %202 = vst [vmem:[#allocation3 + $0x18] sm:$0x38] %v194
    %v203 = vld [vmem:[#allocation2] sm:$0x7]
    %v204 = vld [vmem:[#allocation2 + $0x8] sm:$0x7]
    %v205 = vld [vmem:[#allocation2 + $0x10] sm:$0x7]
    %v206 = vld [vmem:[#allocation2 + $0x18] sm:$0x7]
    %v207 = vld [vmem:[#allocation2 + $0x20] sm:$0x7]
    %vm208 = vcmp.lt.s32.totalorder %v102, 15
    %vm209 = vcmp.lt.s32.totalorder %v103, 15
    %vm210 = vcmp.lt.s32.totalorder %v104, 15
    %vm211 = vcmp.lt.s32.totalorder %v105, 15
    %vm212 = vmand %vm118, %vm208
    %vm213 = vmand %vm119, %vm209
    %vm214 = vmand %vm120, %vm210
    %vm215 = vmand %vm121, %vm211
    %v216 = vsel %vm212, 1, 0
    %v217 = vsel %vm213, 1, 0
    %v218 = vsel %vm214, 1, 0
    %v219 = vsel %vm215, 1, 0
    %vm220 = vcmp.eq.s32.totalorder %v216, 1
    %vm221 = vcmp.eq.s32.totalorder %v217, 1
    %vm222 = vcmp.eq.s32.totalorder %v218, 1
    %vm223 = vcmp.eq.s32.totalorder %v219, 1
    %229 = vrot.lane.b32.xlu0 %v203, 126
    %v230 = vpop.permute.xlu0 %229
    %231 = vrot.lane.b32.xlu0 %v204, 126
    %v232 = vpop.permute.xlu0 %231
    %233 = vrot.lane.b32.xlu0 %v205, 126
    %v234 = vpop.permute.xlu0 %233
    %235 = vrot.lane.b32.xlu0 %v206, 126
    %v236 = vpop.permute.xlu0 %235
    %237 = vrot.lane.b32.xlu0 %v207, 126
    %v238 = vpop.permute.xlu0 %237
    %vm239 = vcmask 1031168
    %v240 = vsel %vm239, %v230, %v232
    %v241 = vsel %vm239, %v232, %v234
    %v242 = vsel %vm239, %v234, %v236
    %v243 = vsel %vm239, %v236, %v238
    %v248 = vsel %vm220, %v240, 0.0
    %v249 = vsel %vm221, %v241, 0.0
    %v250 = vsel %vm222, %v242, 0.0
    %v251 = vsel %vm223, %v243, 0.0
    %v256 = vrot.slane %v248, 2
    %v257 = vrot.slane %v249, 2
    %v258 = vrot.slane %v250, 2
    %v259 = vrot.slane %v251, 2
    %264 = vst [vmem:[#allocation3] sm:$0xc0] %v256
    %265 = vst [vmem:[#allocation3 + $0x8] sm:$0xc0] %v257
    %266 = vst [vmem:[#allocation3 + $0x10] sm:$0xc0] %v258
    %267 = vst [vmem:[#allocation3 + $0x18] sm:$0xc0] %v259
    %268 = vst [vmem:[#allocation3 + $0x20] sm:$0x1] %v256
    %269 = vst [vmem:[#allocation3 + $0x28] sm:$0x1] %v257
    %270 = vst [vmem:[#allocation3 + $0x30] sm:$0x1] %v258
    %271 = vst [vmem:[#allocation3 + $0x38] sm:$0x1] %v259
    %v272 = vld [vmem:[#allocation2] sm:$0x7]
    %v273 = vld [vmem:[#allocation2 + $0x8] sm:$0x7]
    %v274 = vld [vmem:[#allocation2 + $0x10] sm:$0x7]
    %v275 = vld [vmem:[#allocation2 + $0x18] sm:$0x7]
    %v276 = vld [vmem:[#allocation2 + $0x20] sm:$0x7]
    %v277 = vsel %vm122, 1, 0
    %v278 = vsel %vm123, 1, 0
    %v279 = vsel %vm124, 1, 0
    %v280 = vsel %vm125, 1, 0
    %vm281 = vcmp.eq.s32.totalorder %v277, 1
    %vm282 = vcmp.eq.s32.totalorder %v278, 1
    %vm283 = vcmp.eq.s32.totalorder %v279, 1
    %vm284 = vcmp.eq.s32.totalorder %v280, 1
    %290 = vrot.lane.b32.xlu0 %v272, 112
    %v291 = vpop.permute.xlu0 %290
    %292 = vrot.lane.b32.xlu0 %v273, 112
    %v293 = vpop.permute.xlu0 %292
    %294 = vrot.lane.b32.xlu0 %v274, 112
    %v295 = vpop.permute.xlu0 %294
    %296 = vrot.lane.b32.xlu0 %v275, 112
    %v297 = vpop.permute.xlu0 %296
    %298 = vrot.lane.b32.xlu0 %v276, 112
    %v299 = vpop.permute.xlu0 %298
    %vm300 = vcmask 916480
    %v301 = vsel %vm300, %v291, %v293
    %v302 = vsel %vm300, %v293, %v295
    %v303 = vsel %vm300, %v295, %v297
    %v304 = vsel %vm300, %v297, %v299
    %v309 = vsel %vm281, %v301, 0.0
    %v310 = vsel %vm282, %v302, 0.0
    %v311 = vsel %vm283, %v303, 0.0
    %v312 = vsel %vm284, %v304, 0.0
    %v317 = vrot.slane %v309, 7
    %v318 = vrot.slane %v310, 7
    %v319 = vrot.slane %v311, 7
    %v320 = vrot.slane %v312, 7
    %325 = vst [vmem:[#allocation3 + $0x20] sm:$0xe] %v317
    %326 = vst [vmem:[#allocation3 + $0x28] sm:$0xe] %v318
    %327 = vst [vmem:[#allocation3 + $0x30] sm:$0xe] %v319
    %328 = vst [vmem:[#allocation3 + $0x38] sm:$0xe] %v320
    %v329 = vld [vmem:[#allocation2] sm:$0x7]
    %v330 = vld [vmem:[#allocation2 + $0x8] sm:$0x7]
    %v331 = vld [vmem:[#allocation2 + $0x10] sm:$0x7]
    %v332 = vld [vmem:[#allocation2 + $0x18] sm:$0x7]
    %v333 = vld [vmem:[#allocation2 + $0x20] sm:$0x7]
    %v339 = vrot.slane %v329, 4
    %v340 = vrot.slane %v330, 4
    %v341 = vrot.slane %v331, 4
    %v342 = vrot.slane %v332, 4
    %v343 = vrot.slane %v333, 4
    %344 = vrot.lane.b32.xlu0 %v339, 111
    %v345 = vpop.permute.xlu0 %344
    %346 = vrot.lane.b32.xlu0 %v340, 111
    %v347 = vpop.permute.xlu0 %346
    %348 = vrot.lane.b32.xlu0 %v341, 111
    %v349 = vpop.permute.xlu0 %348
    %350 = vrot.lane.b32.xlu0 %v342, 111
    %v351 = vpop.permute.xlu0 %350
    %352 = vrot.lane.b32.xlu0 %v343, 111
    %v353 = vpop.permute.xlu0 %352
    %vm354 = vcmask 908288
    %v355 = vsel %vm354, %v345, %v347
    %v356 = vsel %vm354, %v347, %v349
    %v357 = vsel %vm354, %v349, %v351
    %v358 = vsel %vm354, %v351, %v353
    %363 = vst [vmem:[#allocation3 + $0x20] sm:$0x70] %v355
    %364 = vst [vmem:[#allocation3 + $0x28] sm:$0x70] %v356
    %365 = vst [vmem:[#allocation3 + $0x30] sm:$0x70] %v357
    %366 = vst [vmem:[#allocation3 + $0x38] sm:$0x70] %v358
    %v367 = vld [vmem:[#allocation2] sm:$0x7]
    %v368 = vld [vmem:[#allocation2 + $0x8] sm:$0x7]
    %v369 = vld [vmem:[#allocation2 + $0x10] sm:$0x7]
    %v370 = vld [vmem:[#allocation2 + $0x18] sm:$0x7]
    %v371 = vld [vmem:[#allocation2 + $0x20] sm:$0x7]
    %v372 = vsel %vm208, 1, 0
    %v373 = vsel %vm209, 1, 0
    %v374 = vsel %vm210, 1, 0
    %v375 = vsel %vm211, 1, 0
    %vm376 = vcmp.eq.s32.totalorder %v372, 1
    %vm377 = vcmp.eq.s32.totalorder %v373, 1
    %vm378 = vcmp.eq.s32.totalorder %v374, 1
    %vm379 = vcmp.eq.s32.totalorder %v375, 1
    %385 = vrot.lane.b32.xlu0 %v367, 110
    %v386 = vpop.permute.xlu0 %385
    %387 = vrot.lane.b32.xlu0 %v368, 110
    %v388 = vpop.permute.xlu0 %387
    %389 = vrot.lane.b32.xlu0 %v369, 110
    %v390 = vpop.permute.xlu0 %389
    %391 = vrot.lane.b32.xlu0 %v370, 110
    %v392 = vpop.permute.xlu0 %391
    %393 = vrot.lane.b32.xlu0 %v371, 110
    %v394 = vpop.permute.xlu0 %393
    %vm395 = vcmask 900096
    %v396 = vsel %vm395, %v386, %v388
    %v397 = vsel %vm395, %v388, %v390
    %v398 = vsel %vm395, %v390, %v392
    %v399 = vsel %vm395, %v392, %v394
    %v404 = vsel %vm376, %v396, 0.0
    %v405 = vsel %vm377, %v397, 0.0
    %v406 = vsel %vm378, %v398, 0.0
    %v407 = vsel %vm379, %v399, 0.0
    %v412 = vrot.slane %v404, 1
    %v413 = vrot.slane %v405, 1
    %v414 = vrot.slane %v406, 1
    %v415 = vrot.slane %v407, 1
    %420 = vst [vmem:[#allocation3 + $0x20] sm:$0x80] %v412
    %421 = vst [vmem:[#allocation3 + $0x28] sm:$0x80] %v413
    %422 = vst [vmem:[#allocation3 + $0x30] sm:$0x80] %v414
    %423 = vst [vmem:[#allocation3 + $0x38] sm:$0x80] %v415
    %424 = vst [vmem:[#allocation3 + $0x40] sm:$0x3] %v412
    %425 = vst [vmem:[#allocation3 + $0x48] sm:$0x3] %v413
    %426 = vst [vmem:[#allocation3 + $0x50] sm:$0x3] %v414
    %427 = vst [vmem:[#allocation3 + $0x58] sm:$0x3] %v415
    %v428 = vld [vmem:[#allocation2] sm:$0x7]
    %v429 = vld [vmem:[#allocation2 + $0x8] sm:$0x7]
    %v430 = vld [vmem:[#allocation2 + $0x10] sm:$0x7]
    %v431 = vld [vmem:[#allocation2 + $0x18] sm:$0x7]
    %v432 = vld [vmem:[#allocation2 + $0x20] sm:$0x7]
    %vm433 = vcmp.lt.s32.totalorder %v110, 15
    %vm434 = vcmp.lt.s32.totalorder %v111, 15
    %vm435 = vcmp.lt.s32.totalorder %v112, 15
    %vm436 = vcmp.lt.s32.totalorder %v113, 15
    %vm437 = vmand %vm433, %vm122
    %vm438 = vmand %vm434, %vm123
    %vm439 = vmand %vm435, %vm124
    %vm440 = vmand %vm436, %vm125
    %v441 = vsel %vm437, 1, 0
    %v442 = vsel %vm438, 1, 0
    %v443 = vsel %vm439, 1, 0
    %v444 = vsel %vm440, 1, 0
    %vm445 = vcmp.eq.s32.totalorder %v441, 1
    %vm446 = vcmp.eq.s32.totalorder %v442, 1
    %vm447 = vcmp.eq.s32.totalorder %v443, 1
    %vm448 = vcmp.eq.s32.totalorder %v444, 1
    %454 = vrot.lane.b32.xlu0 %v428, 96
    %v455 = vpop.permute.xlu0 %454
    %456 = vrot.lane.b32.xlu0 %v429, 96
    %v457 = vpop.permute.xlu0 %456
    %458 = vrot.lane.b32.xlu0 %v430, 96
    %v459 = vpop.permute.xlu0 %458
    %460 = vrot.lane.b32.xlu0 %v431, 96
    %v461 = vpop.permute.xlu0 %460
    %462 = vrot.lane.b32.xlu0 %v432, 96
    %v463 = vpop.permute.xlu0 %462
    %vm464 = vcmask 785408
    %v465 = vsel %vm464, %v455, %v457
    %v466 = vsel %vm464, %v457, %v459
    %v467 = vsel %vm464, %v459, %v461
    %v468 = vsel %vm464, %v461, %v463
    %v473 = vsel %vm445, %v465, 0.0
    %v474 = vsel %vm446, %v466, 0.0
    %v475 = vsel %vm447, %v467, 0.0
    %v476 = vsel %vm448, %v468, 0.0
    %v481 = vrot.slane %v473, 6
    %v482 = vrot.slane %v474, 6
    %v483 = vrot.slane %v475, 6
    %v484 = vrot.slane %v476, 6
    %489 = vst [vmem:[#allocation3 + $0x40] sm:$0x1c] %v481
    %490 = vst [vmem:[#allocation3 + $0x48] sm:$0x1c] %v482
    %491 = vst [vmem:[#allocation3 + $0x50] sm:$0x1c] %v483
    %492 = vst [vmem:[#allocation3 + $0x58] sm:$0x1c] %v484
    %v493 = vld [vmem:[#allocation2] sm:$0x7]
    %v494 = vld [vmem:[#allocation2 + $0x8] sm:$0x7]
    %v495 = vld [vmem:[#allocation2 + $0x10] sm:$0x7]
    %v496 = vld [vmem:[#allocation2 + $0x18] sm:$0x7]
    %v497 = vld [vmem:[#allocation2 + $0x20] sm:$0x7]
    %v498 = vsel %vm433, 1, 0
    %v499 = vsel %vm434, 1, 0
    %v500 = vsel %vm435, 1, 0
    %v501 = vsel %vm436, 1, 0
    %vm502 = vcmp.eq.s32.totalorder %v498, 1
    %vm503 = vcmp.eq.s32.totalorder %v499, 1
    %vm504 = vcmp.eq.s32.totalorder %v500, 1
    %vm505 = vcmp.eq.s32.totalorder %v501, 1
    %511 = vrot.lane.b32.xlu0 %v493, 95
    %v512 = vpop.permute.xlu0 %511
    %513 = vrot.lane.b32.xlu0 %v494, 95
    %v514 = vpop.permute.xlu0 %513
    %515 = vrot.lane.b32.xlu0 %v495, 95
    %v516 = vpop.permute.xlu0 %515
    %517 = vrot.lane.b32.xlu0 %v496, 95
    %v518 = vpop.permute.xlu0 %517
    %519 = vrot.lane.b32.xlu0 %v497, 95
    %v520 = vpop.permute.xlu0 %519
    %vm521 = vcmask 777216
    %v522 = vsel %vm521, %v512, %v514
    %v523 = vsel %vm521, %v514, %v516
    %v524 = vsel %vm521, %v516, %v518
    %v525 = vsel %vm521, %v518, %v520
    %v530 = vsel %vm502, %v522, 0.0
    %v531 = vsel %vm503, %v523, 0.0
    %v532 = vsel %vm504, %v524, 0.0
    %v533 = vsel %vm505, %v525, 0.0
    %v538 = vrot.slane %v530, 3
    %v539 = vrot.slane %v531, 3
    %v540 = vrot.slane %v532, 3
    %v541 = vrot.slane %v533, 3
    %546 = vst [vmem:[#allocation3 + $0x40] sm:$0xe0] %v538
    %547 = vst [vmem:[#allocation3 + $0x48] sm:$0xe0] %v539
    %548 = vst [vmem:[#allocation3 + $0x50] sm:$0xe0] %v540
    %549 = vst [vmem:[#allocation3 + $0x58] sm:$0xe0] %v541
    %v550 = vld [vmem:[#allocation2] sm:$0x7]
    %v551 = vld [vmem:[#allocation2 + $0x8] sm:$0x7]
    %v552 = vld [vmem:[#allocation2 + $0x10] sm:$0x7]
    %v553 = vld [vmem:[#allocation2 + $0x18] sm:$0x7]
    %v554 = vld [vmem:[#allocation2 + $0x20] sm:$0x7]
    %vm555 = vmand %vm433, %vm208
    %vm556 = vmand %vm434, %vm209
    %vm557 = vmand %vm435, %vm210
    %vm558 = vmand %vm436, %vm211
    %v559 = vsel %vm555, 1, 0
    %v560 = vsel %vm556, 1, 0
    %v561 = vsel %vm557, 1, 0
    %v562 = vsel %vm558, 1, 0
    %vm563 = vcmp.eq.s32.totalorder %v559, 1
    %vm564 = vcmp.eq.s32.totalorder %v560, 1
    %vm565 = vcmp.eq.s32.totalorder %v561, 1
    %vm566 = vcmp.eq.s32.totalorder %v562, 1
    %572 = vrot.lane.b32.xlu0 %v550, 94
    %v573 = vpop.permute.xlu0 %572
    %574 = vrot.lane.b32.xlu0 %v551, 94
    %v575 = vpop.permute.xlu0 %574
    %576 = vrot.lane.b32.xlu0 %v552, 94
    %v577 = vpop.permute.xlu0 %576
    %578 = vrot.lane.b32.xlu0 %v553, 94
    %v579 = vpop.permute.xlu0 %578
    %580 = vrot.lane.b32.xlu0 %v554, 94
    %v581 = vpop.permute.xlu0 %580
    %vm582 = vcmask 769024
    %v583 = vsel %vm582, %v573, %v575
    %v584 = vsel %vm582, %v575, %v577
    %v585 = vsel %vm582, %v577, %v579
    %v586 = vsel %vm582, %v579, %v581
    %v591 = vsel %vm563, %v583, 0.0
    %v592 = vsel %vm564, %v584, 0.0
    %v593 = vsel %vm565, %v585, 0.0
    %v594 = vsel %vm566, %v586, 0.0
    %595 = vst [vmem:[#allocation3 + $0x60] sm:$0x7] %v591
    %596 = vst [vmem:[#allocation3 + $0x68] sm:$0x7] %v592
    %597 = vst [vmem:[#allocation3 + $0x70] sm:$0x7] %v593
    %598 = vst [vmem:[#allocation3 + $0x78] sm:$0x7] %v594
    %v599 = vld [vmem:[%s1] sm:$0xff]
    %v600 = vld [vmem:[#allocation3] sm:$0xff]
    %v601 = vld [vmem:[#allocation3 + $0x8] sm:$0xff]
    %v602 = vld [vmem:[#allocation3 + $0x10] sm:$0xff]
    %v603 = vld [vmem:[#allocation3 + $0x18] sm:$0xff]
    %v604 = vld [vmem:[#allocation3 + $0x20] sm:$0xff]
    %v605 = vld [vmem:[#allocation3 + $0x28] sm:$0xff]
    %v606 = vld [vmem:[#allocation3 + $0x30] sm:$0xff]
    %v607 = vld [vmem:[#allocation3 + $0x38] sm:$0xff]
    %v608 = vld [vmem:[#allocation3 + $0x40] sm:$0xff]
    %v609 = vld [vmem:[#allocation3 + $0x48] sm:$0xff]
    %v610 = vld [vmem:[#allocation3 + $0x50] sm:$0xff]
    %v611 = vld [vmem:[#allocation3 + $0x58] sm:$0xff]
    %v612 = vld [vmem:[#allocation3 + $0x60] sm:$0x7]
    %v613 = vld [vmem:[#allocation3 + $0x68] sm:$0x7]
    %v614 = vld [vmem:[#allocation3 + $0x70] sm:$0x7]
    %v615 = vld [vmem:[#allocation3 + $0x78] sm:$0x7]
    %vm616 = vcmask 220160
    %v618 = vsel %vm616, %v599, 0
    %vm620 = vcmask 1042432
    %v622 = vsel %vm620, %v612, 0
    %v625 = vsel %vm620, %v613, 0
    %v628 = vsel %vm620, %v614, 0
    %v631 = vsel %vm620, %v615, 0
    %633 = vmatpush.msra.mxu0 0.0
    %634 = vmatpush.msra.mxu0 0.0
    %635 = vmatpush.msra.mxu0 0.0
    %636 = vmatpush.msra.mxu0 0.0
    %637 = vmatpush.msra.mxu0 0.0
    %638 = vmatpush.msra.mxu0 0.0
    %639 = vmatpush.msra.mxu0 0.0
    %640 = vmatpush.msra.mxu0 0.0
    %641 = vmatpush.msra.mxu0 0.0
    %642 = vmatpush.msra.mxu0 0.0
    %643 = vmatpush.msra.mxu0 0.0
    %644 = vmatpush.msra.mxu0 0.0
    %645 = vmatpush.msra.mxu0 %v622
    %646 = vmatpush.msra.mxu0 %v608
    %647 = vmatpush.msra.mxu0 %v604
    %648 = vmatpush.msra.mxu0 %v600
    %649 = vmatmul.f32.gmra.mxu0 %v618
    %v650 = vpop.f32.mrf.mxu0
    %v651 = vadd.f32 0.0, %v650
    %652 = vdwg.mxu0
    %653 = vmatpush.msra.mxu0 0.0
    %654 = vmatpush.msra.mxu0 0.0
    %655 = vmatpush.msra.mxu0 0.0
    %656 = vmatpush.msra.mxu0 0.0
    %657 = vmatpush.msra.mxu0 0.0
    %658 = vmatpush.msra.mxu0 0.0
    %659 = vmatpush.msra.mxu0 0.0
    %660 = vmatpush.msra.mxu0 0.0
    %661 = vmatpush.msra.mxu0 0.0
    %662 = vmatpush.msra.mxu0 0.0
    %663 = vmatpush.msra.mxu0 0.0
    %664 = vmatpush.msra.mxu0 0.0
    %665 = vmatpush.msra.mxu0 %v625
    %666 = vmatpush.msra.mxu0 %v609
    %667 = vmatpush.msra.mxu0 %v605
    %668 = vmatpush.msra.mxu0 %v601
    %669 = vmatmul.f32.gmra.mxu0 %v618
    %v670 = vpop.f32.mrf.mxu0
    %v671 = vadd.f32 0.0, %v670
    %672 = vdwg.mxu0
    %673 = vmatpush.msra.mxu0 0.0
    %674 = vmatpush.msra.mxu0 0.0
    %675 = vmatpush.msra.mxu0 0.0
    %676 = vmatpush.msra.mxu0 0.0
    %677 = vmatpush.msra.mxu0 0.0
    %678 = vmatpush.msra.mxu0 0.0
    %679 = vmatpush.msra.mxu0 0.0
    %680 = vmatpush.msra.mxu0 0.0
    %681 = vmatpush.msra.mxu0 0.0
    %682 = vmatpush.msra.mxu0 0.0
    %683 = vmatpush.msra.mxu0 0.0
    %684 = vmatpush.msra.mxu0 0.0
    %685 = vmatpush.msra.mxu0 %v628
    %686 = vmatpush.msra.mxu0 %v610
    %687 = vmatpush.msra.mxu0 %v606
    %688 = vmatpush.msra.mxu0 %v602
    %689 = vmatmul.f32.gmra.mxu0 %v618
    %v690 = vpop.f32.mrf.mxu0
    %v691 = vadd.f32 0.0, %v690
    %692 = vdwg.mxu0
    %693 = vmatpush.msra.mxu0 0.0
    %694 = vmatpush.msra.mxu0 0.0
    %695 = vmatpush.msra.mxu0 0.0
    %696 = vmatpush.msra.mxu0 0.0
    %697 = vmatpush.msra.mxu0 0.0
    %698 = vmatpush.msra.mxu0 0.0
    %699 = vmatpush.msra.mxu0 0.0
    %700 = vmatpush.msra.mxu0 0.0
    %701 = vmatpush.msra.mxu0 0.0
    %702 = vmatpush.msra.mxu0 0.0
    %703 = vmatpush.msra.mxu0 0.0
    %704 = vmatpush.msra.mxu0 0.0
    %705 = vmatpush.msra.mxu0 %v631
    %706 = vmatpush.msra.mxu0 %v611
    %707 = vmatpush.msra.mxu0 %v607
    %708 = vmatpush.msra.mxu0 %v603
    %709 = vmatmul.f32.gmra.mxu0 %v618
    %v710 = vpop.f32.mrf.mxu0
    %v711 = vadd.f32 0.0, %v710
    %712 = vdwg.mxu0
    %v713 = vadd.f32 %v651, %v671
    %v714 = vadd.f32 %v713, %v691
    %v715 = vadd.f32 %v714, %v711
    %716 = vadd.xlane.f32.xlu0 %v715
    %v717 = vpop.xlane.xlu0 %716
    %v718 = vmul.f32 %v717, 0.001953125
    %v719 = vsub.f32 %v651, %v718
    %v720 = vsub.f32 %v671, %v718
    %v721 = vsub.f32 %v691, %v718
    %v722 = vsub.f32 %v711, %v718
    %v723 = vmul.f32 %v719, %v719
    %v724 = vmul.f32 %v720, %v720
    %v725 = vmul.f32 %v721, %v721
    %v726 = vmul.f32 %v722, %v722
    %v727 = vadd.f32 %v723, %v724
    %v728 = vadd.f32 %v727, %v725
    %v729 = vadd.f32 %v728, %v726
    %730 = vadd.xlane.f32.xlu0 %v729
    %v731 = vpop.xlane.xlu0 %730
    %v732 = vmul.f32 %v731, 0.001953125
    %v733 = vld [vmem:[%s4] sm:$0xff]
    %v734 = vadd.f32 %v732, 1e-05
    %v735 = vrsqrt.pop %v734
    %v736 = vmul.f32 %v735, %v734
    %v737 = vmul.f32 %v736, %v735
    %v738 = vmul.f32 0.5, %v737
    %v739 = vsub.f32 1.5, %v738
    %v740 = vmul.f32 %v735, %v739
    %vm741 = vweird.f32 %v734
    %vm742 = vweird.f32 %v735
    %vm743 = vmor %vm741, %vm742
    %v744 = vsel %vm743, %v735, %v740
    %v745 = vmul.f32 %v733, %v744
    %747 = vset.pattern.permute.xlu0 0
    %748 = vperm.xlu0 %747, %v745
    %v749 = vpop.permute.xlu0 %748
    %v751 = vmul.f32 %v719, %v749
    %v752 = vmul.f32 %v720, %v749
    %v753 = vmul.f32 %v721, %v749
    %v754 = vmul.f32 %v722, %v749
    %756 = vset.pattern.permute.xlu0 1
    %757 = vperm.xlu0 %756, %v733
    %v758 = vpop.permute.xlu0 %757
    %v760 = vadd.f32 %v751, %v758
    %v761 = vadd.f32 %v752, %v758
    %v762 = vadd.f32 %v753, %v758
    %v763 = vadd.f32 %v754, %v758
    %v764 = vmax.f32 %v760, 0.0
    %v765 = vmax.f32 %v761, 0.0
    %v766 = vmax.f32 %v762, 0.0
    %v767 = vmax.f32 %v763, 0.0
    %768 = vst [vmem:[%s9] sm:$0xff] %v764
    %769 = vst [vmem:[%s9 + $0x8] sm:$0xff] %v765
    %770 = vst [vmem:[%s9 + $0x10] sm:$0xff] %v766
    %771 = vst [vmem:[%s9 + $0x18] sm:$0xff] %v767
    %776 = vrot.lane.b32.xlu0 %v764, 17
    %v777 = vpop.permute.xlu0 %776
    %778 = vrot.lane.b32.xlu0 %v765, 17
    %v779 = vpop.permute.xlu0 %778
    %780 = vrot.lane.b32.xlu0 %v766, 17
    %v781 = vpop.permute.xlu0 %780
    %782 = vrot.lane.b32.xlu0 %v767, 17
    %v783 = vpop.permute.xlu0 %782
    %v784 = vsel %vm81, %v777, %v779
    %v785 = vsel %vm81, %v779, %v781
    %v786 = vsel %vm81, %v781, %v783
    %vm792 = vcmask 1047688
    %793 = vst.msk [vmem:[#allocation2] sm:$0xff] %vm792, %v777
    %794 = vst [vmem:[#allocation2 + $0x8] sm:$0xff] %v784
    %795 = vst [vmem:[#allocation2 + $0x10] sm:$0xff] %v785
    %796 = vst [vmem:[#allocation2 + $0x18] sm:$0xff] %v786
    %797 = vst.msk [vmem:[#allocation2 + $0x20] sm:$0xff] %vm81, %v783
    %v798 = vld [vmem:[#allocation2] sm:$0xff]
    %v799 = vld [vmem:[#allocation2 + $0x8] sm:$0xff]
    %v800 = vld [vmem:[#allocation2 + $0x10] sm:$0xff]
    %v801 = vld [vmem:[#allocation2 + $0x18] sm:$0xff]
    %v802 = vsel %vm134, %v798, 0.0
    %v803 = vsel %vm135, %v799, 0.0
    %v804 = vsel %vm136, %v800, 0.0
    %v805 = vsel %vm137, %v801, 0.0
    %806 = vst [vmem:[#allocation3] sm:$0xff] %v802
    %807 = vst [vmem:[#allocation3 + $0x8] sm:$0xff] %v803
    %808 = vst [vmem:[#allocation3 + $0x10] sm:$0xff] %v804
    %809 = vst [vmem:[#allocation3 + $0x18] sm:$0xff] %v805
    %v810 = vld [vmem:[#allocation2] sm:$0xff]
    %v811 = vld [vmem:[#allocation2 + $0x8] sm:$0xff]
    %v812 = vld [vmem:[#allocation2 + $0x10] sm:$0xff]
    %v813 = vld [vmem:[#allocation2 + $0x18] sm:$0xff]
    %v814 = vld [vmem:[#allocation2 + $0x20] sm:$0xff]
    %820 = vrot.lane.b32.xlu0 %v810, 127
    %v821 = vpop.permute.xlu0 %820
    %822 = vrot.lane.b32.xlu0 %v811, 127
    %v823 = vpop.permute.xlu0 %822
    %824 = vrot.lane.b32.xlu0 %v812, 127
    %v825 = vpop.permute.xlu0 %824
    %826 = vrot.lane.b32.xlu0 %v813, 127
    %v827 = vpop.permute.xlu0 %826
    %828 = vrot.lane.b32.xlu0 %v814, 127
    %v829 = vpop.permute.xlu0 %828
    %v830 = vsel %vm174, %v821, %v823
    %v831 = vsel %vm174, %v823, %v825
    %v832 = vsel %vm174, %v825, %v827
    %v833 = vsel %vm174, %v827, %v829
    %v838 = vsel %vm155, %v830, 0.0
    %v839 = vsel %vm156, %v831, 0.0
    %v840 = vsel %vm157, %v832, 0.0
    %v841 = vsel %vm158, %v833, 0.0
    %842 = vst [vmem:[#allocation3 + $0x20] sm:$0xff] %v838
    %843 = vst [vmem:[#allocation3 + $0x28] sm:$0xff] %v839
    %844 = vst [vmem:[#allocation3 + $0x30] sm:$0xff] %v840
    %845 = vst [vmem:[#allocation3 + $0x38] sm:$0xff] %v841
    %v846 = vld [vmem:[#allocation2] sm:$0xff]
    %v847 = vld [vmem:[#allocation2 + $0x8] sm:$0xff]
    %v848 = vld [vmem:[#allocation2 + $0x10] sm:$0xff]
    %v849 = vld [vmem:[#allocation2 + $0x18] sm:$0xff]
    %v850 = vld [vmem:[#allocation2 + $0x20] sm:$0xff]
    %856 = vrot.lane.b32.xlu0 %v846, 126
    %v857 = vpop.permute.xlu0 %856
    %858 = vrot.lane.b32.xlu0 %v847, 126
    %v859 = vpop.permute.xlu0 %858
    %860 = vrot.lane.b32.xlu0 %v848, 126
    %v861 = vpop.permute.xlu0 %860
    %862 = vrot.lane.b32.xlu0 %v849, 126
    %v863 = vpop.permute.xlu0 %862
    %864 = vrot.lane.b32.xlu0 %v850, 126
    %v865 = vpop.permute.xlu0 %864
    %v866 = vsel %vm239, %v857, %v859
    %v867 = vsel %vm239, %v859, %v861
    %v868 = vsel %vm239, %v861, %v863
    %v869 = vsel %vm239, %v863, %v865
    %v874 = vsel %vm220, %v866, 0.0
    %v875 = vsel %vm221, %v867, 0.0
    %v876 = vsel %vm222, %v868, 0.0
    %v877 = vsel %vm223, %v869, 0.0
    %878 = vst [vmem:[#allocation3 + $0x40] sm:$0xff] %v874
    %879 = vst [vmem:[#allocation3 + $0x48] sm:$0xff] %v875
    %880 = vst [vmem:[#allocation3 + $0x50] sm:$0xff] %v876
    %881 = vst [vmem:[#allocation3 + $0x58] sm:$0xff] %v877
    %v882 = vld [vmem:[#allocation2] sm:$0xff]
    %v883 = vld [vmem:[#allocation2 + $0x8] sm:$0xff]
    %v884 = vld [vmem:[#allocation2 + $0x10] sm:$0xff]
    %v885 = vld [vmem:[#allocation2 + $0x18] sm:$0xff]
    %v886 = vld [vmem:[#allocation2 + $0x20] sm:$0xff]
    %892 = vrot.lane.b32.xlu0 %v882, 112
    %v893 = vpop.permute.xlu0 %892
    %894 = vrot.lane.b32.xlu0 %v883, 112
    %v895 = vpop.permute.xlu0 %894
    %896 = vrot.lane.b32.xlu0 %v884, 112
    %v897 = vpop.permute.xlu0 %896
    %898 = vrot.lane.b32.xlu0 %v885, 112
    %v899 = vpop.permute.xlu0 %898
    %900 = vrot.lane.b32.xlu0 %v886, 112
    %v901 = vpop.permute.xlu0 %900
    %v902 = vsel %vm300, %v893, %v895
    %v903 = vsel %vm300, %v895, %v897
    %v904 = vsel %vm300, %v897, %v899
    %v905 = vsel %vm300, %v899, %v901
    %v910 = vsel %vm281, %v902, 0.0
    %v911 = vsel %vm282, %v903, 0.0
    %v912 = vsel %vm283, %v904, 0.0
    %v913 = vsel %vm284, %v905, 0.0
    %914 = vst [vmem:[#allocation3 + $0x60] sm:$0xff] %v910
    %915 = vst [vmem:[#allocation3 + $0x68] sm:$0xff] %v911
    %916 = vst [vmem:[#allocation3 + $0x70] sm:$0xff] %v912
    %917 = vst [vmem:[#allocation3 + $0x78] sm:$0xff] %v913
    %v918 = vld [vmem:[#allocation2] sm:$0xff]
    %v919 = vld [vmem:[#allocation2 + $0x8] sm:$0xff]
    %v920 = vld [vmem:[#allocation2 + $0x10] sm:$0xff]
    %v921 = vld [vmem:[#allocation2 + $0x18] sm:$0xff]
    %v922 = vld [vmem:[#allocation2 + $0x20] sm:$0xff]
    %928 = vrot.lane.b32.xlu0 %v918, 111
    %v929 = vpop.permute.xlu0 %928
    %930 = vrot.lane.b32.xlu0 %v919, 111
    %v931 = vpop.permute.xlu0 %930
    %932 = vrot.lane.b32.xlu0 %v920, 111
    %v933 = vpop.permute.xlu0 %932
    %934 = vrot.lane.b32.xlu0 %v921, 111
    %v935 = vpop.permute.xlu0 %934
    %936 = vrot.lane.b32.xlu0 %v922, 111
    %v937 = vpop.permute.xlu0 %936
    %v938 = vsel %vm354, %v929, %v931
    %v939 = vsel %vm354, %v931, %v933
    %v940 = vsel %vm354, %v933, %v935
    %v941 = vsel %vm354, %v935, %v937
    %946 = vst [vmem:[#allocation3 + $0x80] sm:$0xff] %v938
    %947 = vst [vmem:[#allocation3 + $0x88] sm:$0xff] %v939
    %948 = vst [vmem:[#allocation3 + $0x90] sm:$0xff] %v940
    %949 = vst [vmem:[#allocation3 + $0x98] sm:$0xff] %v941
    %v950 = vld [vmem:[#allocation2] sm:$0xff]
    %v951 = vld [vmem:[#allocation2 + $0x8] sm:$0xff]
    %v952 = vld [vmem:[#allocation2 + $0x10] sm:$0xff]
    %v953 = vld [vmem:[#allocation2 + $0x18] sm:$0xff]
    %v954 = vld [vmem:[#allocation2 + $0x20] sm:$0xff]
    %960 = vrot.lane.b32.xlu0 %v950, 110
    %v961 = vpop.permute.xlu0 %960
    %962 = vrot.lane.b32.xlu0 %v951, 110
    %v963 = vpop.permute.xlu0 %962
    %964 = vrot.lane.b32.xlu0 %v952, 110
    %v965 = vpop.permute.xlu0 %964
    %966 = vrot.lane.b32.xlu0 %v953, 110
    %v967 = vpop.permute.xlu0 %966
    %968 = vrot.lane.b32.xlu0 %v954, 110
    %v969 = vpop.permute.xlu0 %968
    %v970 = vsel %vm395, %v961, %v963
    %v971 = vsel %vm395, %v963, %v965
    %v972 = vsel %vm395, %v965, %v967
    %v973 = vsel %vm395, %v967, %v969
    %v978 = vsel %vm376, %v970, 0.0
    %v979 = vsel %vm377, %v971, 0.0
    %v980 = vsel %vm378, %v972, 0.0
    %v981 = vsel %vm379, %v973, 0.0
    %982 = vst [vmem:[#allocation3 + $0xa0] sm:$0xff] %v978
    %983 = vst [vmem:[#allocation3 + $0xa8] sm:$0xff] %v979
    %984 = vst [vmem:[#allocation3 + $0xb0] sm:$0xff] %v980
    %985 = vst [vmem:[#allocation3 + $0xb8] sm:$0xff] %v981
    %v986 = vld [vmem:[#allocation2] sm:$0xff]
    %v987 = vld [vmem:[#allocation2 + $0x8] sm:$0xff]
    %v988 = vld [vmem:[#allocation2 + $0x10] sm:$0xff]
    %v989 = vld [vmem:[#allocation2 + $0x18] sm:$0xff]
    %v990 = vld [vmem:[#allocation2 + $0x20] sm:$0xff]
    %996 = vrot.lane.b32.xlu0 %v986, 96
    %v997 = vpop.permute.xlu0 %996
    %998 = vrot.lane.b32.xlu0 %v987, 96
    %v999 = vpop.permute.xlu0 %998
    %1000 = vrot.lane.b32.xlu0 %v988, 96
    %v1001 = vpop.permute.xlu0 %1000
    %1002 = vrot.lane.b32.xlu0 %v989, 96
    %v1003 = vpop.permute.xlu0 %1002
    %1004 = vrot.lane.b32.xlu0 %v990, 96
    %v1005 = vpop.permute.xlu0 %1004
    %v1006 = vsel %vm464, %v997, %v999
    %v1007 = vsel %vm464, %v999, %v1001
    %v1008 = vsel %vm464, %v1001, %v1003
    %v1009 = vsel %vm464, %v1003, %v1005
    %v1014 = vsel %vm445, %v1006, 0.0
    %v1015 = vsel %vm446, %v1007, 0.0
    %v1016 = vsel %vm447, %v1008, 0.0
    %v1017 = vsel %vm448, %v1009, 0.0
    %1018 = vst [vmem:[#allocation3 + $0xc0] sm:$0xff] %v1014
    %1019 = vst [vmem:[#allocation3 + $0xc8] sm:$0xff] %v1015
    %1020 = vst [vmem:[#allocation3 + $0xd0] sm:$0xff] %v1016
    %1021 = vst [vmem:[#allocation3 + $0xd8] sm:$0xff] %v1017
    %v1022 = vld [vmem:[#allocation2] sm:$0xff]
    %v1023 = vld [vmem:[#allocation2 + $0x8] sm:$0xff]
    %v1024 = vld [vmem:[#allocation2 + $0x10] sm:$0xff]
    %v1025 = vld [vmem:[#allocation2 + $0x18] sm:$0xff]
    %v1026 = vld [vmem:[#allocation2 + $0x20] sm:$0xff]
    %1032 = vrot.lane.b32.xlu0 %v1022, 95
    %v1033 = vpop.permute.xlu0 %1032
    %1034 = vrot.lane.b32.xlu0 %v1023, 95
    %v1035 = vpop.permute.xlu0 %1034
    %1036 = vrot.lane.b32.xlu0 %v1024, 95
    %v1037 = vpop.permute.xlu0 %1036
    %1038 = vrot.lane.b32.xlu0 %v1025, 95
    %v1039 = vpop.permute.xlu0 %1038
    %1040 = vrot.lane.b32.xlu0 %v1026, 95
    %v1041 = vpop.permute.xlu0 %1040
    %v1042 = vsel %vm521, %v1033, %v1035
    %v1043 = vsel %vm521, %v1035, %v1037
    %v1044 = vsel %vm521, %v1037, %v1039
    %v1045 = vsel %vm521, %v1039, %v1041
    %v1050 = vsel %vm502, %v1042, 0.0
    %v1051 = vsel %vm503, %v1043, 0.0
    %v1052 = vsel %vm504, %v1044, 0.0
    %v1053 = vsel %vm505, %v1045, 0.0
    %1054 = vst [vmem:[#allocation3 + $0xe0] sm:$0xff] %v1050
    %1055 = vst [vmem:[#allocation3 + $0xe8] sm:$0xff] %v1051
    %1056 = vst [vmem:[#allocation3 + $0xf0] sm:$0xff] %v1052
    %1057 = vst [vmem:[#allocation3 + $0xf8] sm:$0xff] %v1053
    %v1058 = vld [vmem:[#allocation2] sm:$0xff]
    %v1059 = vld [vmem:[#allocation2 + $0x8] sm:$0xff]
    %v1060 = vld [vmem:[#allocation2 + $0x10] sm:$0xff]
    %v1061 = vld [vmem:[#allocation2 + $0x18] sm:$0xff]
    %v1062 = vld [vmem:[#allocation2 + $0x20] sm:$0xff]
    %1068 = vrot.lane.b32.xlu0 %v1058, 94
    %v1069 = vpop.permute.xlu0 %1068
    %1070 = vrot.lane.b32.xlu0 %v1059, 94
    %v1071 = vpop.permute.xlu0 %1070
    %1072 = vrot.lane.b32.xlu0 %v1060, 94
    %v1073 = vpop.permute.xlu0 %1072
    %1074 = vrot.lane.b32.xlu0 %v1061, 94
    %v1075 = vpop.permute.xlu0 %1074
    %1076 = vrot.lane.b32.xlu0 %v1062, 94
    %v1077 = vpop.permute.xlu0 %1076
    %v1078 = vsel %vm582, %v1069, %v1071
    %v1079 = vsel %vm582, %v1071, %v1073
    %v1080 = vsel %vm582, %v1073, %v1075
    %v1081 = vsel %vm582, %v1075, %v1077
    %v1086 = vsel %vm563, %v1078, 0.0
    %v1087 = vsel %vm564, %v1079, 0.0
    %v1088 = vsel %vm565, %v1080, 0.0
    %v1089 = vsel %vm566, %v1081, 0.0
    %1090 = vst [vmem:[#allocation3 + $0x100] sm:$0xff] %v1086
    %1091 = vst [vmem:[#allocation3 + $0x108] sm:$0xff] %v1087
    %1092 = vst [vmem:[#allocation3 + $0x110] sm:$0xff] %v1088
    %1093 = vst [vmem:[#allocation3 + $0x118] sm:$0xff] %v1089
    %v1094 = vld [vmem:[%s2] sm:$0xff]
    %v1095 = vld [vmem:[%s2 + $0x8] sm:$0xff]
    %v1096 = vld [vmem:[#allocation3] sm:$0xff]
    %v1097 = vld [vmem:[#allocation3 + $0x8] sm:$0xff]
    %v1098 = vld [vmem:[#allocation3 + $0x10] sm:$0xff]
    %v1099 = vld [vmem:[#allocation3 + $0x18] sm:$0xff]
    %v1100 = vld [vmem:[#allocation3 + $0x20] sm:$0xff]
    %v1101 = vld [vmem:[#allocation3 + $0x28] sm:$0xff]
    %v1102 = vld [vmem:[#allocation3 + $0x30] sm:$0xff]
    %v1103 = vld [vmem:[#allocation3 + $0x38] sm:$0xff]
    %v1104 = vld [vmem:[#allocation3 + $0x40] sm:$0xff]
    %v1105 = vld [vmem:[#allocation3 + $0x48] sm:$0xff]
    %v1106 = vld [vmem:[#allocation3 + $0x50] sm:$0xff]
    %v1107 = vld [vmem:[#allocation3 + $0x58] sm:$0xff]
    %v1108 = vld [vmem:[#allocation3 + $0x60] sm:$0xff]
    %v1109 = vld [vmem:[#allocation3 + $0x68] sm:$0xff]
    %v1110 = vld [vmem:[#allocation3 + $0x70] sm:$0xff]
    %v1111 = vld [vmem:[#allocation3 + $0x78] sm:$0xff]
    %v1112 = vld [vmem:[#allocation3 + $0x80] sm:$0xff]
    %v1113 = vld [vmem:[#allocation3 + $0x88] sm:$0xff]
    %v1114 = vld [vmem:[#allocation3 + $0x90] sm:$0xff]
    %v1115 = vld [vmem:[#allocation3 + $0x98] sm:$0xff]
    %v1116 = vld [vmem:[#allocation3 + $0xa0] sm:$0xff]
    %v1117 = vld [vmem:[#allocation3 + $0xa8] sm:$0xff]
    %v1118 = vld [vmem:[#allocation3 + $0xb0] sm:$0xff]
    %v1119 = vld [vmem:[#allocation3 + $0xb8] sm:$0xff]
    %v1120 = vld [vmem:[#allocation3 + $0xc0] sm:$0xff]
    %v1121 = vld [vmem:[#allocation3 + $0xc8] sm:$0xff]
    %v1122 = vld [vmem:[#allocation3 + $0xd0] sm:$0xff]
    %v1123 = vld [vmem:[#allocation3 + $0xd8] sm:$0xff]
    %v1124 = vld [vmem:[#allocation3 + $0xe0] sm:$0xff]
    %v1125 = vld [vmem:[#allocation3 + $0xe8] sm:$0xff]
    %v1126 = vld [vmem:[#allocation3 + $0xf0] sm:$0xff]
    %v1127 = vld [vmem:[#allocation3 + $0xf8] sm:$0xff]
    %v1128 = vld [vmem:[#allocation3 + $0x100] sm:$0xff]
    %v1129 = vld [vmem:[#allocation3 + $0x108] sm:$0xff]
    %v1130 = vld [vmem:[#allocation3 + $0x110] sm:$0xff]
    %v1131 = vld [vmem:[#allocation3 + $0x118] sm:$0xff]
    %vm1132 = vcmask 588800
    %v1134 = vsel %vm1132, %v1094, 0
    %v1137 = vsel %vm1132, %v1095, 0
    %1139 = vmatpush.msra.mxu0 0.0
    %1140 = vmatpush.msra.mxu0 0.0
    %1141 = vmatpush.msra.mxu0 0.0
    %1142 = vmatpush.msra.mxu0 0.0
    %1143 = vmatpush.msra.mxu0 0.0
    %1144 = vmatpush.msra.mxu0 0.0
    %1145 = vmatpush.msra.mxu0 0.0
    %1146 = vmatpush.msra.mxu0 %v1128
    %1147 = vmatpush.msra.mxu0 %v1124
    %1148 = vmatpush.msra.mxu0 %v1120
    %1149 = vmatpush.msra.mxu0 %v1116
    %1150 = vmatpush.msra.mxu0 %v1112
    %1151 = vmatpush.msra.mxu0 %v1108
    %1152 = vmatpush.msra.mxu0 %v1104
    %1153 = vmatpush.msra.mxu0 %v1100
    %1154 = vmatpush.msra.mxu0 %v1096
    %1155 = vmatmul.f32.gmra.mxu0 %v1134
    %v1156 = vpop.f32.mrf.mxu0
    %v1157 = vadd.f32 0.0, %v1156
    %1158 = vmatmul.f32.gmra.mxu0 %v1137
    %v1159 = vpop.f32.mrf.mxu0
    %v1160 = vadd.f32 0.0, %v1159
    %1161 = vdwg.mxu0
    %1162 = vmatpush.msra.mxu0 0.0
    %1163 = vmatpush.msra.mxu0 0.0
    %1164 = vmatpush.msra.mxu0 0.0
    %1165 = vmatpush.msra.mxu0 0.0
    %1166 = vmatpush.msra.mxu0 0.0
    %1167 = vmatpush.msra.mxu0 0.0
    %1168 = vmatpush.msra.mxu0 0.0
    %1169 = vmatpush.msra.mxu0 %v1129
    %1170 = vmatpush.msra.mxu0 %v1125
    %1171 = vmatpush.msra.mxu0 %v1121
    %1172 = vmatpush.msra.mxu0 %v1117
    %1173 = vmatpush.msra.mxu0 %v1113
    %1174 = vmatpush.msra.mxu0 %v1109
    %1175 = vmatpush.msra.mxu0 %v1105
    %1176 = vmatpush.msra.mxu0 %v1101
    %1177 = vmatpush.msra.mxu0 %v1097
    %1178 = vmatmul.f32.gmra.mxu0 %v1134
    %v1179 = vpop.f32.mrf.mxu0
    %v1180 = vadd.f32 0.0, %v1179
    %1181 = vmatmul.f32.gmra.mxu0 %v1137
    %v1182 = vpop.f32.mrf.mxu0
    %v1183 = vadd.f32 0.0, %v1182
    %1184 = vdwg.mxu0
    %1185 = vmatpush.msra.mxu0 0.0
    %1186 = vmatpush.msra.mxu0 0.0
    %1187 = vmatpush.msra.mxu0 0.0
    %1188 = vmatpush.msra.mxu0 0.0
    %1189 = vmatpush.msra.mxu0 0.0
    %1190 = vmatpush.msra.mxu0 0.0
    %1191 = vmatpush.msra.mxu0 0.0
    %1192 = vmatpush.msra.mxu0 %v1130
    %1193 = vmatpush.msra.mxu0 %v1126
    %1194 = vmatpush.msra.mxu0 %v1122
    %1195 = vmatpush.msra.mxu0 %v1118
    %1196 = vmatpush.msra.mxu0 %v1114
    %1197 = vmatpush.msra.mxu0 %v1110
    %1198 = vmatpush.msra.mxu0 %v1106
    %1199 = vmatpush.msra.mxu0 %v1102
    %1200 = vmatpush.msra.mxu0 %v1098
    %1201 = vmatmul.f32.gmra.mxu0 %v1134
    %v1202 = vpop.f32.mrf.mxu0
    %v1203 = vadd.f32 0.0, %v1202
    %1204 = vmatmul.f32.gmra.mxu0 %v1137
    %v1205 = vpop.f32.mrf.mxu0
    %v1206 = vadd.f32 0.0, %v1205
    %1207 = vdwg.mxu0
    %1208 = vmatpush.msra.mxu0 0.0
    %1209 = vmatpush.msra.mxu0 0.0
    %1210 = vmatpush.msra.mxu0 0.0
    %1211 = vmatpush.msra.mxu0 0.0
    %1212 = vmatpush.msra.mxu0 0.0
    %1213 = vmatpush.msra.mxu0 0.0
    %1214 = vmatpush.msra.mxu0 0.0
    %1215 = vmatpush.msra.mxu0 %v1131
    %1216 = vmatpush.msra.mxu0 %v1127
    %1217 = vmatpush.msra.mxu0 %v1123
    %1218 = vmatpush.msra.mxu0 %v1119
    %1219 = vmatpush.msra.mxu0 %v1115
    %1220 = vmatpush.msra.mxu0 %v1111
    %1221 = vmatpush.msra.mxu0 %v1107
    %1222 = vmatpush.msra.mxu0 %v1103
    %1223 = vmatpush.msra.mxu0 %v1099
    %1224 = vmatmul.f32.gmra.mxu0 %v1134
    %v1225 = vpop.f32.mrf.mxu0
    %v1226 = vadd.f32 0.0, %v1225
    %1227 = vmatmul.f32.gmra.mxu0 %v1137
    %v1228 = vpop.f32.mrf.mxu0
    %v1229 = vadd.f32 0.0, %v1228
    %1230 = vdwg.mxu0
    %v1231 = vld [vmem:[#allocation4] sm:$0xff]
    %v1232 = vld [vmem:[#allocation4 + $0x8] sm:$0xff]
    %v1233 = vld [vmem:[#allocation4 + $0x10] sm:$0xff]
    %v1234 = vld [vmem:[#allocation4 + $0x18] sm:$0xff]
    %v1235 = vld [vmem:[#allocation4 + $0x20] sm:$0xff]
    %v1236 = vld [vmem:[#allocation4 + $0x28] sm:$0xff]
    %v1237 = vld [vmem:[#allocation4 + $0x30] sm:$0xff]
    %v1238 = vld [vmem:[#allocation4 + $0x38] sm:$0xff]
    %v1239 = vld [vmem:[#allocation4 + $0x40] sm:$0xff]
    %v1240 = vld [vmem:[#allocation4 + $0x48] sm:$0xff]
    %v1241 = vld [vmem:[#allocation4 + $0x50] sm:$0xff]
    %v1242 = vld [vmem:[#allocation4 + $0x58] sm:$0xff]
    %v1243 = vld [vmem:[#allocation4 + $0x60] sm:$0xff]
    %v1244 = vld [vmem:[#allocation4 + $0x68] sm:$0xff]
    %v1245 = vld [vmem:[#allocation4 + $0x70] sm:$0xff]
    %v1246 = vld [vmem:[#allocation4 + $0x78] sm:$0xff]
    %v1247 = vld [vmem:[#allocation4 + $0x80] sm:$0xff]
    %v1248 = vld [vmem:[#allocation4 + $0x88] sm:$0xff]
    %v1249 = vld [vmem:[#allocation4 + $0x90] sm:$0xff]
    %v1250 = vld [vmem:[#allocation4 + $0x98] sm:$0xff]
    %v1251 = vld [vmem:[#allocation4 + $0xa0] sm:$0xff]
    %v1252 = vld [vmem:[#allocation4 + $0xa8] sm:$0xff]
    %v1253 = vld [vmem:[#allocation4 + $0xb0] sm:$0xff]
    %v1254 = vld [vmem:[#allocation4 + $0xb8] sm:$0xff]
    %v1255 = vld [vmem:[#allocation4 + $0xc0] sm:$0xff]
    %v1256 = vld [vmem:[#allocation4 + $0xc8] sm:$0xff]
    %v1257 = vld [vmem:[#allocation4 + $0xd0] sm:$0xff]
    %v1258 = vld [vmem:[#allocation4 + $0xd8] sm:$0xff]
    %v1259 = vld [vmem:[#allocation4 + $0xe0] sm:$0xff]
    %v1260 = vld [vmem:[#allocation4 + $0xe8] sm:$0xff]
    %v1261 = vld [vmem:[#allocation4 + $0xf0] sm:$0xff]
    %v1262 = vld [vmem:[#allocation4 + $0xf8] sm:$0xff]
    %v1263 = vld [vmem:[#allocation4 + $0x100] sm:$0xff]
    %v1264 = vld [vmem:[#allocation4 + $0x108] sm:$0xff]
    %v1265 = vld [vmem:[#allocation4 + $0x110] sm:$0xff]
    %v1266 = vld [vmem:[#allocation4 + $0x118] sm:$0xff]
    %v1267 = vld [vmem:[#allocation4 + $0x120] sm:$0xff]
    %v1268 = vld [vmem:[#allocation4 + $0x128] sm:$0xff]
    %v1269 = vld [vmem:[#allocation4 + $0x130] sm:$0xff]
    %v1270 = vld [vmem:[#allocation4 + $0x138] sm:$0xff]
    %v1271 = vld [vmem:[#allocation4 + $0x140] sm:$0xff]
    %v1272 = vld [vmem:[#allocation4 + $0x148] sm:$0xff]
    %v1273 = vld [vmem:[#allocation4 + $0x150] sm:$0xff]
    %v1274 = vld [vmem:[#allocation4 + $0x158] sm:$0xff]
    %v1275 = vld [vmem:[#allocation4 + $0x160] sm:$0xff]
    %v1276 = vld [vmem:[#allocation4 + $0x168] sm:$0xff]
    %v1277 = vld [vmem:[#allocation4 + $0x170] sm:$0xff]
    %v1278 = vld [vmem:[#allocation4 + $0x178] sm:$0xff]
    %v1279 = vld [vmem:[#allocation4 + $0x180] sm:$0xff]
    %v1280 = vld [vmem:[#allocation4 + $0x188] sm:$0xff]
    %v1281 = vld [vmem:[#allocation4 + $0x190] sm:$0xff]
    %v1282 = vld [vmem:[#allocation4 + $0x198] sm:$0xff]
    %v1283 = vld [vmem:[#allocation4 + $0x1a0] sm:$0xff]
    %v1284 = vld [vmem:[#allocation4 + $0x1a8] sm:$0xff]
    %v1285 = vld [vmem:[#allocation4 + $0x1b0] sm:$0xff]
    %v1286 = vld [vmem:[#allocation4 + $0x1b8] sm:$0xff]
    %v1287 = vld [vmem:[#allocation4 + $0x1c0] sm:$0xff]
    %v1288 = vld [vmem:[#allocation4 + $0x1c8] sm:$0xff]
    %v1289 = vld [vmem:[#allocation4 + $0x1d0] sm:$0xff]
    %v1290 = vld [vmem:[#allocation4 + $0x1d8] sm:$0xff]
    %v1291 = vld [vmem:[#allocation4 + $0x1e0] sm:$0xff]
    %v1292 = vld [vmem:[#allocation4 + $0x1e8] sm:$0xff]
    %v1293 = vld [vmem:[#allocation4 + $0x1f0] sm:$0xff]
    %v1294 = vld [vmem:[#allocation4 + $0x1f8] sm:$0xff]
    %1295 = vmatpush.msra.mxu0 %v1246
    %1296 = vmatpush.msra.mxu0 %v1245
    %1297 = vmatpush.msra.mxu0 %v1244
    %1298 = vmatpush.msra.mxu0 %v1243
    %1299 = vmatpush.msra.mxu0 %v1242
    %1300 = vmatpush.msra.mxu0 %v1241
    %1301 = vmatpush.msra.mxu0 %v1240
    %1302 = vmatpush.msra.mxu0 %v1239
    %1303 = vmatpush.msra.mxu0 %v1238
    %1304 = vmatpush.msra.mxu0 %v1237
    %1305 = vmatpush.msra.mxu0 %v1236
    %1306 = vmatpush.msra.mxu0 %v1235
    %1307 = vmatpush.msra.mxu0 %v1234
    %1308 = vmatpush.msra.mxu0 %v1233
    %1309 = vmatpush.msra.mxu0 %v1232
    %1310 = vmatpush.msra.mxu0 %v1231
    %1311 = vmatmul.f32.gmra.mxu0 %v1157
    %v1312 = vpop.f32.mrf.mxu0
    %v1313 = vadd.f32 0.0, %v1312
    %1314 = vmatmul.f32.gmra.mxu0 %v1160
    %v1315 = vpop.f32.mrf.mxu0
    %v1316 = vadd.f32 0.0, %v1315
    %1317 = vdwg.mxu0
    %1318 = vmatpush.msra.mxu0 %v1262
    %1319 = vmatpush.msra.mxu0 %v1261
    %1320 = vmatpush.msra.mxu0 %v1260
    %1321 = vmatpush.msra.mxu0 %v1259
    %1322 = vmatpush.msra.mxu0 %v1258
    %1323 = vmatpush.msra.mxu0 %v1257
    %1324 = vmatpush.msra.mxu0 %v1256
    %1325 = vmatpush.msra.mxu0 %v1255
    %1326 = vmatpush.msra.mxu0 %v1254
    %1327 = vmatpush.msra.mxu0 %v1253
    %1328 = vmatpush.msra.mxu0 %v1252
    %1329 = vmatpush.msra.mxu0 %v1251
    %1330 = vmatpush.msra.mxu0 %v1250
    %1331 = vmatpush.msra.mxu0 %v1249
    %1332 = vmatpush.msra.mxu0 %v1248
    %1333 = vmatpush.msra.mxu0 %v1247
    %1334 = vmatmul.f32.gmra.mxu0 %v1180
    %v1335 = vpop.f32.mrf.mxu0
    %v1336 = vadd.f32 %v1313, %v1335
    %1337 = vmatmul.f32.gmra.mxu0 %v1183
    %v1338 = vpop.f32.mrf.mxu0
    %v1339 = vadd.f32 %v1316, %v1338
    %1340 = vdwg.mxu0
    %1341 = vmatpush.msra.mxu0 %v1278
    %1342 = vmatpush.msra.mxu0 %v1277
    %1343 = vmatpush.msra.mxu0 %v1276
    %1344 = vmatpush.msra.mxu0 %v1275
    %1345 = vmatpush.msra.mxu0 %v1274
    %1346 = vmatpush.msra.mxu0 %v1273
    %1347 = vmatpush.msra.mxu0 %v1272
    %1348 = vmatpush.msra.mxu0 %v1271
    %1349 = vmatpush.msra.mxu0 %v1270
    %1350 = vmatpush.msra.mxu0 %v1269
    %1351 = vmatpush.msra.mxu0 %v1268
    %1352 = vmatpush.msra.mxu0 %v1267
    %1353 = vmatpush.msra.mxu0 %v1266
    %1354 = vmatpush.msra.mxu0 %v1265
    %1355 = vmatpush.msra.mxu0 %v1264
    %1356 = vmatpush.msra.mxu0 %v1263
    %1357 = vmatmul.f32.gmra.mxu0 %v1203
    %v1358 = vpop.f32.mrf.mxu0
    %v1359 = vadd.f32 %v1336, %v1358
    %1360 = vmatmul.f32.gmra.mxu0 %v1206
    %v1361 = vpop.f32.mrf.mxu0
    %v1362 = vadd.f32 %v1339, %v1361
    %1363 = vdwg.mxu0
    %1364 = vmatpush.msra.mxu0 %v1294
    %1365 = vmatpush.msra.mxu0 %v1293
    %1366 = vmatpush.msra.mxu0 %v1292
    %1367 = vmatpush.msra.mxu0 %v1291
    %1368 = vmatpush.msra.mxu0 %v1290
    %1369 = vmatpush.msra.mxu0 %v1289
    %1370 = vmatpush.msra.mxu0 %v1288
    %1371 = vmatpush.msra.mxu0 %v1287
    %1372 = vmatpush.msra.mxu0 %v1286
    %1373 = vmatpush.msra.mxu0 %v1285
    %1374 = vmatpush.msra.mxu0 %v1284
    %1375 = vmatpush.msra.mxu0 %v1283
    %1376 = vmatpush.msra.mxu0 %v1282
    %1377 = vmatpush.msra.mxu0 %v1281
    %1378 = vmatpush.msra.mxu0 %v1280
    %1379 = vmatpush.msra.mxu0 %v1279
    %1380 = vmatmul.f32.gmra.mxu0 %v1226
    %v1381 = vpop.f32.mrf.mxu0
    %v1382 = vadd.f32 %v1359, %v1381
    %1383 = vmatmul.f32.gmra.mxu0 %v1229
    %v1384 = vpop.f32.mrf.mxu0
    %v1385 = vadd.f32 %v1362, %v1384
    %1386 = vdwg.mxu0
    %1387 = vadd.xlane.f32.xlu0 %v1382
    %v1388 = vpop.xlane.xlu0 %1387
    %1389 = vadd.xlane.f32.xlu0 %v1385
    %v1390 = vpop.xlane.xlu0 %1389
    %v1391 = vmul.f32 %v1388, 0.0078125
    %v1392 = vmul.f32 %v1390, 0.0078125
    %v1393 = vsub.f32 %v1382, %v1391
    %v1394 = vsub.f32 %v1385, %v1392
    %v1395 = vmul.f32 %v1393, %v1393
    %v1396 = vmul.f32 %v1394, %v1394
    %1397 = vadd.xlane.f32.xlu0 %v1395
    %v1398 = vpop.xlane.xlu0 %1397
    %1399 = vadd.xlane.f32.xlu0 %v1396
    %v1400 = vpop.xlane.xlu0 %1399
    %v1401 = vmul.f32 %v1398, 0.0078125
    %v1402 = vmul.f32 %v1400, 0.0078125
    %v1403 = vld [vmem:[%s5] sm:$0xff]
    %v1404 = vld [vmem:[%s5 + $0x8] sm:$0xff]
    %v1405 = vadd.f32 %v1401, 1e-05
    %v1406 = vadd.f32 %v1402, 1e-05
    %v1407 = vrsqrt.pop %v1405
    %v1408 = vmul.f32 %v1407, %v1405
    %v1409 = vmul.f32 %v1408, %v1407
    %v1410 = vmul.f32 0.5, %v1409
    %v1411 = vsub.f32 1.5, %v1410
    %v1412 = vmul.f32 %v1407, %v1411
    %vm1413 = vweird.f32 %v1405
    %vm1414 = vweird.f32 %v1407
    %vm1415 = vmor %vm1413, %vm1414
    %v1416 = vsel %vm1415, %v1407, %v1412
    %v1417 = vrsqrt.pop %v1406
    %v1418 = vmul.f32 %v1417, %v1406
    %v1419 = vmul.f32 %v1418, %v1417
    %v1420 = vmul.f32 0.5, %v1419
    %v1421 = vsub.f32 1.5, %v1420
    %v1422 = vmul.f32 %v1417, %v1421
    %vm1423 = vweird.f32 %v1406
    %vm1424 = vweird.f32 %v1417
    %vm1425 = vmor %vm1423, %vm1424
    %v1426 = vsel %vm1425, %v1417, %v1422
    %v1427 = vmul.f32 %v1403, %v1416
    %v1428 = vmul.f32 %v1404, %v1426
    %1430 = vset.pattern.permute.xlu0 0
    %1431 = vperm.xlu0 %1430, %v1427
    %v1432 = vpop.permute.xlu0 %1431
    %1435 = vset.pattern.permute.xlu0 0
    %1436 = vperm.xlu0 %1435, %v1428
    %v1437 = vpop.permute.xlu0 %1436
    %v1439 = vmul.f32 %v1393, %v1432
    %v1440 = vmul.f32 %v1394, %v1437
    %1442 = vset.pattern.permute.xlu0 1
    %1443 = vperm.xlu0 %1442, %v1403
    %v1444 = vpop.permute.xlu0 %1443
    %1447 = vset.pattern.permute.xlu0 1
    %1448 = vperm.xlu0 %1447, %v1404
    %v1449 = vpop.permute.xlu0 %1448
    %v1451 = vadd.f32 %v1439, %v1444
    %v1452 = vadd.f32 %v1440, %v1449
    %v1453 = vmax.f32 %v1451, 0.0
    %v1454 = vmax.f32 %v1452, 0.0
    %1455 = vst [vmem:[%s10] sm:$0xff] %v1453
    %1456 = vst [vmem:[%s10 + $0x8] sm:$0xff] %v1454
    %1459 = vrot.lane.b32.xlu0 %v1453, 17
    %v1460 = vpop.permute.xlu0 %1459
    %1461 = vrot.lane.b32.xlu0 %v1454, 17
    %v1462 = vpop.permute.xlu0 %1461
    %1465 = vst.msk [vmem:[#allocation2] sm:$0xff] %vm792, %v1460
    %1466 = vst.msk [vmem:[#allocation2 + $0x8] sm:$0xff] %vm81, %v1460
    %1467 = vst.msk [vmem:[#allocation2 + $0x28] sm:$0xff] %vm792, %v1462
    %1468 = vst.msk [vmem:[#allocation2 + $0x30] sm:$0xff] %vm81, %v1462
    %v1469 = vand.u32 %v98, 7
    %v1470 = vshra.s32 %v98, 3
    %v1471 = vand.u32 %v1470, 7
    %v1472 = vld [vmem:[#allocation2] sm:$0xff]
    %v1473 = vld [vmem:[#allocation2 + $0x8] sm:$0xff]
    %v1474 = vld [vmem:[#allocation2 + $0x28] sm:$0xff]
    %v1475 = vld [vmem:[#allocation2 + $0x30] sm:$0xff]
    %vm1476 = vcmp.ge.s32.totalorder %v1471, 1
    %vm1477 = vcmp.ge.s32.totalorder %v1469, 1
    %vm1478 = vmand %vm1476, %vm1477
    %v1479 = vsel %vm1478, 1, 0
    %vm1480 = vcmp.eq.s32.totalorder %v1479, 1
    %1485 = vrot.lane.b32.xlu0 %v1472, 120
    %v1486 = vpop.permute.xlu0 %1485
    %1487 = vrot.lane.b32.xlu0 %v1473, 120
    %v1488 = vpop.permute.xlu0 %1487
    %1489 = vrot.lane.b32.xlu0 %v1474, 120
    %v1490 = vpop.permute.xlu0 %1489
    %1491 = vrot.lane.b32.xlu0 %v1475, 120
    %v1492 = vpop.permute.xlu0 %1491
    %vm1493 = vcmask 982016
    %v1494 = vsel %vm1493, %v1486, %v1488
    %v1495 = vsel %vm1493, %v1490, %v1492
    %v1498 = vsel %vm1480, %v1494, 0.0
    %v1499 = vsel %vm1480, %v1495, 0.0
    %1500 = vst [vmem:[#allocation3] sm:$0xff] %v1498
    %1501 = vst [vmem:[#allocation3 + $0x20] sm:$0xff] %v1499
    %v1502 = vld [vmem:[#allocation2] sm:$0xff]
    %v1503 = vld [vmem:[#allocation2 + $0x8] sm:$0xff]
    %v1504 = vld [vmem:[#allocation2 + $0x28] sm:$0xff]
    %v1505 = vld [vmem:[#allocation2 + $0x30] sm:$0xff]
    %v1506 = vsel %vm1476, 1, 0
    %vm1507 = vcmp.eq.s32.totalorder %v1506, 1
    %1512 = vrot.lane.b32.xlu0 %v1502, 119
    %v1513 = vpop.permute.xlu0 %1512
    %1514 = vrot.lane.b32.xlu0 %v1503, 119
    %v1515 = vpop.permute.xlu0 %1514
    %1516 = vrot.lane.b32.xlu0 %v1504, 119
    %v1517 = vpop.permute.xlu0 %1516
    %1518 = vrot.lane.b32.xlu0 %v1505, 119
    %v1519 = vpop.permute.xlu0 %1518
    %vm1520 = vcmask 973824
    %v1521 = vsel %vm1520, %v1513, %v1515
    %v1522 = vsel %vm1520, %v1517, %v1519
    %v1525 = vsel %vm1507, %v1521, 0.0
    %v1526 = vsel %vm1507, %v1522, 0.0
    %1527 = vst [vmem:[#allocation3 + $0x40] sm:$0xff] %v1525
    %1528 = vst [vmem:[#allocation3 + $0x60] sm:$0xff] %v1526
    %v1529 = vld [vmem:[#allocation2] sm:$0xff]
    %v1530 = vld [vmem:[#allocation2 + $0x8] sm:$0xff]
    %v1531 = vld [vmem:[#allocation2 + $0x28] sm:$0xff]
    %v1532 = vld [vmem:[#allocation2 + $0x30] sm:$0xff]
    %vm1533 = vcmp.lt.s32.totalorder %v1469, 7
    %vm1534 = vmand %vm1476, %vm1533
    %v1535 = vsel %vm1534, 1, 0
    %vm1536 = vcmp.eq.s32.totalorder %v1535, 1
    %1541 = vrot.lane.b32.xlu0 %v1529, 118
    %v1542 = vpop.permute.xlu0 %1541
    %1543 = vrot.lane.b32.xlu0 %v1530, 118
    %v1544 = vpop.permute.xlu0 %1543
    %1545 = vrot.lane.b32.xlu0 %v1531, 118
    %v1546 = vpop.permute.xlu0 %1545
    %1547 = vrot.lane.b32.xlu0 %v1532, 118
    %v1548 = vpop.permute.xlu0 %1547
    %vm1549 = vcmask 965632
    %v1550 = vsel %vm1549, %v1542, %v1544
    %v1551 = vsel %vm1549, %v1546, %v1548
    %v1554 = vsel %vm1536, %v1550, 0.0
    %v1555 = vsel %vm1536, %v1551, 0.0
    %1556 = vst [vmem:[#allocation3 + $0x80] sm:$0xff] %v1554
    %1557 = vst [vmem:[#allocation3 + $0xa0] sm:$0xff] %v1555
    %v1558 = vld [vmem:[#allocation2] sm:$0xff]
    %v1559 = vld [vmem:[#allocation2 + $0x8] sm:$0xff]
    %v1560 = vld [vmem:[#allocation2 + $0x28] sm:$0xff]
    %v1561 = vld [vmem:[#allocation2 + $0x30] sm:$0xff]
    %v1562 = vsel %vm1477, 1, 0
    %vm1563 = vcmp.eq.s32.totalorder %v1562, 1
    %1568 = vrot.lane.b32.xlu0 %v1558, 112
    %v1569 = vpop.permute.xlu0 %1568
    %1570 = vrot.lane.b32.xlu0 %v1559, 112
    %v1571 = vpop.permute.xlu0 %1570
    %1572 = vrot.lane.b32.xlu0 %v1560, 112
    %v1573 = vpop.permute.xlu0 %1572
    %1574 = vrot.lane.b32.xlu0 %v1561, 112
    %v1575 = vpop.permute.xlu0 %1574
    %v1576 = vsel %vm300, %v1569, %v1571
    %v1577 = vsel %vm300, %v1573, %v1575
    %v1580 = vsel %vm1563, %v1576, 0.0
    %v1581 = vsel %vm1563, %v1577, 0.0
    %1582 = vst [vmem:[#allocation3 + $0xc0] sm:$0xff] %v1580
    %1583 = vst [vmem:[#allocation3 + $0xe0] sm:$0xff] %v1581
    %v1584 = vld [vmem:[#allocation2] sm:$0xff]
    %v1585 = vld [vmem:[#allocation2 + $0x8] sm:$0xff]
    %v1586 = vld [vmem:[#allocation2 + $0x28] sm:$0xff]
    %v1587 = vld [vmem:[#allocation2 + $0x30] sm:$0xff]
    %1592 = vrot.lane.b32.xlu0 %v1584, 111
    %v1593 = vpop.permute.xlu0 %1592
    %1594 = vrot.lane.b32.xlu0 %v1585, 111
    %v1595 = vpop.permute.xlu0 %1594
    %1596 = vrot.lane.b32.xlu0 %v1586, 111
    %v1597 = vpop.permute.xlu0 %1596
    %1598 = vrot.lane.b32.xlu0 %v1587, 111
    %v1599 = vpop.permute.xlu0 %1598
    %v1600 = vsel %vm354, %v1593, %v1595
    %v1601 = vsel %vm354, %v1597, %v1599
    %1604 = vst [vmem:[#allocation3 + $0x100] sm:$0xff] %v1600
    %1605 = vst [vmem:[#allocation3 + $0x120] sm:$0xff] %v1601
    %v1606 = vld [vmem:[#allocation2] sm:$0xff]
    %v1607 = vld [vmem:[#allocation2 + $0x8] sm:$0xff]
    %v1608 = vld [vmem:[#allocation2 + $0x28] sm:$0xff]
    %v1609 = vld [vmem:[#allocation2 + $0x30] sm:$0xff]
    %v1610 = vsel %vm1533, 1, 0
    %vm1611 = vcmp.eq.s32.totalorder %v1610, 1
    %1616 = vrot.lane.b32.xlu0 %v1606, 110
    %v1617 = vpop.permute.xlu0 %1616
    %1618 = vrot.lane.b32.xlu0 %v1607, 110
    %v1619 = vpop.permute.xlu0 %1618
    %1620 = vrot.lane.b32.xlu0 %v1608, 110
    %v1621 = vpop.permute.xlu0 %1620
    %1622 = vrot.lane.b32.xlu0 %v1609, 110
    %v1623 = vpop.permute.xlu0 %1622
    %v1624 = vsel %vm395, %v1617, %v1619
    %v1625 = vsel %vm395, %v1621, %v1623
    %v1628 = vsel %vm1611, %v1624, 0.0
    %v1629 = vsel %vm1611, %v1625, 0.0
    %1630 = vst [vmem:[#allocation3 + $0x140] sm:$0xff] %v1628
    %1631 = vst [vmem:[#allocation3 + $0x160] sm:$0xff] %v1629
    %v1632 = vld [vmem:[#allocation2] sm:$0xff]
    %v1633 = vld [vmem:[#allocation2 + $0x8] sm:$0xff]
    %v1634 = vld [vmem:[#allocation2 + $0x28] sm:$0xff]
    %v1635 = vld [vmem:[#allocation2 + $0x30] sm:$0xff]
    %vm1636 = vcmp.lt.s32.totalorder %v1471, 7
    %vm1637 = vmand %vm1636, %vm1477
    %v1638 = vsel %vm1637, 1, 0
    %vm1639 = vcmp.eq.s32.totalorder %v1638, 1
    %1644 = vrot.lane.b32.xlu0 %v1632, 104
    %v1645 = vpop.permute.xlu0 %1644
    %1646 = vrot.lane.b32.xlu0 %v1633, 104
    %v1647 = vpop.permute.xlu0 %1646
    %1648 = vrot.lane.b32.xlu0 %v1634, 104
    %v1649 = vpop.permute.xlu0 %1648
    %1650 = vrot.lane.b32.xlu0 %v1635, 104
    %v1651 = vpop.permute.xlu0 %1650
    %vm1652 = vcmask 850944
    %v1653 = vsel %vm1652, %v1645, %v1647
    %v1654 = vsel %vm1652, %v1649, %v1651
    %v1657 = vsel %vm1639, %v1653, 0.0
    %v1658 = vsel %vm1639, %v1654, 0.0
    %1659 = vst [vmem:[#allocation3 + $0x180] sm:$0xff] %v1657
    %1660 = vst [vmem:[#allocation3 + $0x1a0] sm:$0xff] %v1658
    %v1661 = vld [vmem:[#allocation2] sm:$0xff]
    %v1662 = vld [vmem:[#allocation2 + $0x8] sm:$0xff]
    %v1663 = vld [vmem:[#allocation2 + $0x28] sm:$0xff]
    %v1664 = vld [vmem:[#allocation2 + $0x30] sm:$0xff]
    %v1665 = vsel %vm1636, 1, 0
    %vm1666 = vcmp.eq.s32.totalorder %v1665, 1
    %1671 = vrot.lane.b32.xlu0 %v1661, 103
    %v1672 = vpop.permute.xlu0 %1671
    %1673 = vrot.lane.b32.xlu0 %v1662, 103
    %v1674 = vpop.permute.xlu0 %1673
    %1675 = vrot.lane.b32.xlu0 %v1663, 103
    %v1676 = vpop.permute.xlu0 %1675
    %1677 = vrot.lane.b32.xlu0 %v1664, 103
    %v1678 = vpop.permute.xlu0 %1677
    %vm1679 = vcmask 842752
    %v1680 = vsel %vm1679, %v1672, %v1674
    %v1681 = vsel %vm1679, %v1676, %v1678
    %v1684 = vsel %vm1666, %v1680, 0.0
    %v1685 = vsel %vm1666, %v1681, 0.0
    %1686 = vst [vmem:[#allocation3 + $0x1c0] sm:$0xff] %v1684
    %1687 = vst [vmem:[#allocation3 + $0x1e0] sm:$0xff] %v1685
    %v1688 = vld [vmem:[#allocation2] sm:$0xff]
    %v1689 = vld [vmem:[#allocation2 + $0x8] sm:$0xff]
    %v1690 = vld [vmem:[#allocation2 + $0x28] sm:$0xff]
    %v1691 = vld [vmem:[#allocation2 + $0x30] sm:$0xff]
    %vm1692 = vmand %vm1636, %vm1533
    %v1693 = vsel %vm1692, 1, 0
    %vm1694 = vcmp.eq.s32.totalorder %v1693, 1
    %1699 = vrot.lane.b32.xlu0 %v1688, 102
    %v1700 = vpop.permute.xlu0 %1699
    %1701 = vrot.lane.b32.xlu0 %v1689, 102
    %v1702 = vpop.permute.xlu0 %1701
    %1703 = vrot.lane.b32.xlu0 %v1690, 102
    %v1704 = vpop.permute.xlu0 %1703
    %1705 = vrot.lane.b32.xlu0 %v1691, 102
    %v1706 = vpop.permute.xlu0 %1705
    %vm1707 = vcmask 834560
    %v1708 = vsel %vm1707, %v1700, %v1702
    %v1709 = vsel %vm1707, %v1704, %v1706
    %v1712 = vsel %vm1694, %v1708, 0.0
    %v1713 = vsel %vm1694, %v1709, 0.0
    %1714 = vst [vmem:[#allocation3 + $0x200] sm:$0xff] %v1712
    %1715 = vst [vmem:[#allocation3 + $0x220] sm:$0xff] %v1713
    %v1716 = vld [vmem:[%s3] sm:$0xff]
    %v1717 = vld [vmem:[%s3 + $0x8] sm:$0xff]
    %v1718 = vld [vmem:[%s3 + $0x10] sm:$0xff]
    %v1719 = vld [vmem:[%s3 + $0x18] sm:$0xff]
    %v1720 = vld [vmem:[%s3 + $0x20] sm:$0xff]
    %v1721 = vld [vmem:[%s3 + $0x28] sm:$0xff]
    %v1722 = vld [vmem:[%s3 + $0x30] sm:$0xff]
    %v1723 = vld [vmem:[%s3 + $0x38] sm:$0xff]
    %v1724 = vld [vmem:[#allocation3] sm:$0xff]
    %v1725 = vld [vmem:[#allocation3 + $0x20] sm:$0xff]
    %v1726 = vld [vmem:[#allocation3 + $0x40] sm:$0xff]
    %v1727 = vld [vmem:[#allocation3 + $0x60] sm:$0xff]
    %v1728 = vld [vmem:[#allocation3 + $0x80] sm:$0xff]
    %v1729 = vld [vmem:[#allocation3 + $0xa0] sm:$0xff]
    %v1730 = vld [vmem:[#allocation3 + $0xc0] sm:$0xff]
    %v1731 = vld [vmem:[#allocation3 + $0xe0] sm:$0xff]
    %v1732 = vld [vmem:[#allocation3 + $0x100] sm:$0xff]
    %v1733 = vld [vmem:[#allocation3 + $0x120] sm:$0xff]
    %v1734 = vld [vmem:[#allocation3 + $0x140] sm:$0xff]
    %v1735 = vld [vmem:[#allocation3 + $0x160] sm:$0xff]
    %v1736 = vld [vmem:[#allocation3 + $0x180] sm:$0xff]
    %v1737 = vld [vmem:[#allocation3 + $0x1a0] sm:$0xff]
    %v1738 = vld [vmem:[#allocation3 + $0x1c0] sm:$0xff]
    %v1739 = vld [vmem:[#allocation3 + $0x1e0] sm:$0xff]
    %v1740 = vld [vmem:[#allocation3 + $0x200] sm:$0xff]
    %v1741 = vld [vmem:[#allocation3 + $0x220] sm:$0xff]
    %vm1742 = vcmask 130048
    %v1744 = vsel %vm1742, %v1717, 0
    %v1747 = vsel %vm1742, %v1719, 0
    %v1750 = vsel %vm1742, %v1721, 0
    %v1753 = vsel %vm1742, %v1723, 0
    %1755 = vmatpush.msra.mxu0 %v1739
    %1756 = vmatpush.msra.mxu0 %v1738
    %1757 = vmatpush.msra.mxu0 %v1737
    %1758 = vmatpush.msra.mxu0 %v1736
    %1759 = vmatpush.msra.mxu0 %v1735
    %1760 = vmatpush.msra.mxu0 %v1734
    %1761 = vmatpush.msra.mxu0 %v1733
    %1762 = vmatpush.msra.mxu0 %v1732
    %1763 = vmatpush.msra.mxu0 %v1731
    %1764 = vmatpush.msra.mxu0 %v1730
    %1765 = vmatpush.msra.mxu0 %v1729
    %1766 = vmatpush.msra.mxu0 %v1728
    %1767 = vmatpush.msra.mxu0 %v1727
    %1768 = vmatpush.msra.mxu0 %v1726
    %1769 = vmatpush.msra.mxu0 %v1725
    %1770 = vmatpush.msra.mxu0 %v1724
    %1771 = vmatmul.f32.gmra.mxu0 %v1716
    %v1772 = vpop.f32.mrf.mxu0
    %v1773 = vadd.f32 0.0, %v1772
    %1774 = vmatmul.f32.gmra.mxu0 %v1718
    %v1775 = vpop.f32.mrf.mxu0
    %v1776 = vadd.f32 0.0, %v1775
    %1777 = vmatmul.f32.gmra.mxu0 %v1720
    %v1778 = vpop.f32.mrf.mxu0
    %v1779 = vadd.f32 0.0, %v1778
    %1780 = vmatmul.f32.gmra.mxu0 %v1722
    %v1781 = vpop.f32.mrf.mxu0
    %v1782 = vadd.f32 0.0, %v1781
    %1783 = vdwg.mxu0
    %1784 = vmatpush.msra.mxu0 0.0
    %1785 = vmatpush.msra.mxu0 0.0
    %1786 = vmatpush.msra.mxu0 0.0
    %1787 = vmatpush.msra.mxu0 0.0
    %1788 = vmatpush.msra.mxu0 0.0
    %1789 = vmatpush.msra.mxu0 0.0
    %1790 = vmatpush.msra.mxu0 0.0
    %1791 = vmatpush.msra.mxu0 0.0
    %1792 = vmatpush.msra.mxu0 0.0
    %1793 = vmatpush.msra.mxu0 0.0
    %1794 = vmatpush.msra.mxu0 0.0
    %1795 = vmatpush.msra.mxu0 0.0
    %1796 = vmatpush.msra.mxu0 0.0
    %1797 = vmatpush.msra.mxu0 0.0
    %1798 = vmatpush.msra.mxu0 %v1741
    %1799 = vmatpush.msra.mxu0 %v1740
    %1800 = vmatmul.f32.gmra.mxu0 %v1744
    %v1801 = vpop.f32.mrf.mxu0
    %v1802 = vadd.f32 %v1773, %v1801
    %1803 = vmatmul.f32.gmra.mxu0 %v1747
    %v1804 = vpop.f32.mrf.mxu0
    %v1805 = vadd.f32 %v1776, %v1804
    %1806 = vmatmul.f32.gmra.mxu0 %v1750
    %v1807 = vpop.f32.mrf.mxu0
    %v1808 = vadd.f32 %v1779, %v1807
    %1809 = vmatmul.f32.gmra.mxu0 %v1753
    %v1810 = vpop.f32.mrf.mxu0
    %v1811 = vadd.f32 %v1782, %v1810
    %1812 = vdwg.mxu0
    %v1813 = vld [vmem:[%s8] sm:$0xff]
    %v1814 = vld [vmem:[%s8 + $0x8] sm:$0xff]
    %v1815 = vld [vmem:[%s8 + $0x10] sm:$0xff]
    %v1816 = vld [vmem:[%s8 + $0x18] sm:$0xff]
    %v1817 = vld [vmem:[%s8 + $0x20] sm:$0xff]
    %v1818 = vld [vmem:[%s8 + $0x28] sm:$0xff]
    %v1819 = vld [vmem:[%s8 + $0x30] sm:$0xff]
    %v1820 = vld [vmem:[%s8 + $0x38] sm:$0xff]
    %v1821 = vld [vmem:[%s8 + $0x40] sm:$0xff]
    %v1822 = vld [vmem:[%s8 + $0x48] sm:$0xff]
    %v1823 = vld [vmem:[%s8 + $0x50] sm:$0xff]
    %v1824 = vld [vmem:[%s8 + $0x58] sm:$0xff]
    %v1825 = vld [vmem:[%s8 + $0x60] sm:$0xff]
    %v1826 = vld [vmem:[%s8 + $0x68] sm:$0xff]
    %v1827 = vld [vmem:[%s8 + $0x70] sm:$0xff]
    %v1828 = vld [vmem:[%s8 + $0x78] sm:$0xff]
    %1829 = vmatpush.msra.mxu0 %v1828
    %1830 = vmatpush.msra.mxu0 %v1827
    %1831 = vmatpush.msra.mxu0 %v1826
    %1832 = vmatpush.msra.mxu0 %v1825
    %1833 = vmatpush.msra.mxu0 %v1824
    %1834 = vmatpush.msra.mxu0 %v1823
    %1835 = vmatpush.msra.mxu0 %v1822
    %1836 = vmatpush.msra.mxu0 %v1821
    %1837 = vmatpush.msra.mxu0 %v1820
    %1838 = vmatpush.msra.mxu0 %v1819
    %1839 = vmatpush.msra.mxu0 %v1818
    %1840 = vmatpush.msra.mxu0 %v1817
    %1841 = vmatpush.msra.mxu0 %v1816
    %1842 = vmatpush.msra.mxu0 %v1815
    %1843 = vmatpush.msra.mxu0 %v1814
    %1844 = vmatpush.msra.mxu0 %v1813
    %1845 = vmatmul.f32.gmra.mxu0 %v1802
    %v1846 = vpop.f32.mrf.mxu0
    %v1847 = vadd.f32 0.0, %v1846
    %1848 = vmatmul.f32.gmra.mxu0 %v1805
    %v1849 = vpop.f32.mrf.mxu0
    %v1850 = vadd.f32 0.0, %v1849
    %1851 = vmatmul.f32.gmra.mxu0 %v1808
    %v1852 = vpop.f32.mrf.mxu0
    %v1853 = vadd.f32 0.0, %v1852
    %1854 = vmatmul.f32.gmra.mxu0 %v1811
    %v1855 = vpop.f32.mrf.mxu0
    %v1856 = vadd.f32 0.0, %v1855
    %1857 = vdwg.mxu0
    %vm1858 = vcmask 261120
    %v1859 = vsel %vm1858, %v1847, 0.0
    %1860 = vadd.xlane.f32.xlu0 %v1859
    %v1861 = vpop.xlane.xlu0 %1860
    %v1862 = vsel %vm1858, %v1850, 0.0
    %1863 = vadd.xlane.f32.xlu0 %v1862
    %v1864 = vpop.xlane.xlu0 %1863
    %v1865 = vsel %vm1858, %v1853, 0.0
    %1866 = vadd.xlane.f32.xlu0 %v1865
    %v1867 = vpop.xlane.xlu0 %1866
    %v1868 = vsel %vm1858, %v1856, 0.0
    %1869 = vadd.xlane.f32.xlu0 %v1868
    %v1870 = vpop.xlane.xlu0 %1869
    %v1871 = vmul.f32 %v1861, 0.03125
    %v1872 = vmul.f32 %v1864, 0.03125
    %v1873 = vmul.f32 %v1867, 0.03125
    %v1874 = vmul.f32 %v1870, 0.03125
    %v1875 = vsub.f32 %v1847, %v1871
    %v1876 = vsub.f32 %v1850, %v1872
    %v1877 = vsub.f32 %v1853, %v1873
    %v1878 = vsub.f32 %v1856, %v1874
    %v1879 = vmul.f32 %v1875, %v1875
    %v1880 = vmul.f32 %v1876, %v1876
    %v1881 = vmul.f32 %v1877, %v1877
    %v1882 = vmul.f32 %v1878, %v1878
    %v1883 = vsel %vm1858, %v1879, 0.0
    %1884 = vadd.xlane.f32.xlu0 %v1883
    %v1885 = vpop.xlane.xlu0 %1884
    %v1886 = vsel %vm1858, %v1880, 0.0
    %1887 = vadd.xlane.f32.xlu0 %v1886
    %v1888 = vpop.xlane.xlu0 %1887
    %v1889 = vsel %vm1858, %v1881, 0.0
    %1890 = vadd.xlane.f32.xlu0 %v1889
    %v1891 = vpop.xlane.xlu0 %1890
    %v1892 = vsel %vm1858, %v1882, 0.0
    %1893 = vadd.xlane.f32.xlu0 %v1892
    %v1894 = vpop.xlane.xlu0 %1893
    %v1895 = vmul.f32 %v1885, 0.03125
    %v1896 = vmul.f32 %v1888, 0.03125
    %v1897 = vmul.f32 %v1891, 0.03125
    %v1898 = vmul.f32 %v1894, 0.03125
    %v1899 = vld [vmem:[%s6] sm:$0xff]
    %v1900 = vld [vmem:[%s6 + $0x8] sm:$0xff]
    %v1901 = vld [vmem:[%s6 + $0x10] sm:$0xff]
    %v1902 = vld [vmem:[%s6 + $0x18] sm:$0xff]
    %v1903 = vadd.f32 %v1895, 1e-05
    %v1904 = vadd.f32 %v1896, 1e-05
    %v1905 = vadd.f32 %v1897, 1e-05
    %v1906 = vadd.f32 %v1898, 1e-05
    %v1907 = vrsqrt.pop %v1903
    %v1908 = vmul.f32 %v1907, %v1903
    %v1909 = vmul.f32 %v1908, %v1907
    %v1910 = vmul.f32 0.5, %v1909
    %v1911 = vsub.f32 1.5, %v1910
    %v1912 = vmul.f32 %v1907, %v1911
    %vm1913 = vweird.f32 %v1903
    %vm1914 = vweird.f32 %v1907
    %vm1915 = vmor %vm1913, %vm1914
    %v1916 = vsel %vm1915, %v1907, %v1912
    %v1917 = vrsqrt.pop %v1904
    %v1918 = vmul.f32 %v1917, %v1904
    %v1919 = vmul.f32 %v1918, %v1917
    %v1920 = vmul.f32 0.5, %v1919
    %v1921 = vsub.f32 1.5, %v1920
    %v1922 = vmul.f32 %v1917, %v1921
    %vm1923 = vweird.f32 %v1904
    %vm1924 = vweird.f32 %v1917
    %vm1925 = vmor %vm1923, %vm1924
    %v1926 = vsel %vm1925, %v1917, %v1922
    %v1927 = vrsqrt.pop %v1905
    %v1928 = vmul.f32 %v1927, %v1905
    %v1929 = vmul.f32 %v1928, %v1927
    %v1930 = vmul.f32 0.5, %v1929
    %v1931 = vsub.f32 1.5, %v1930
    %v1932 = vmul.f32 %v1927, %v1931
    %vm1933 = vweird.f32 %v1905
    %vm1934 = vweird.f32 %v1927
    %vm1935 = vmor %vm1933, %vm1934
    %v1936 = vsel %vm1935, %v1927, %v1932
    %v1937 = vrsqrt.pop %v1906
    %v1938 = vmul.f32 %v1937, %v1906
    %v1939 = vmul.f32 %v1938, %v1937
    %v1940 = vmul.f32 0.5, %v1939
    %v1941 = vsub.f32 1.5, %v1940
    %v1942 = vmul.f32 %v1937, %v1941
    %vm1943 = vweird.f32 %v1906
    %vm1944 = vweird.f32 %v1937
    %vm1945 = vmor %vm1943, %vm1944
    %v1946 = vsel %vm1945, %v1937, %v1942
    %v1947 = vmul.f32 %v1899, %v1916
    %v1948 = vmul.f32 %v1900, %v1926
    %v1949 = vmul.f32 %v1901, %v1936
    %v1950 = vmul.f32 %v1902, %v1946
    %1952 = vset.pattern.permute.xlu0 0
    %1953 = vperm.xlu0 %1952, %v1947
    %v1954 = vpop.permute.xlu0 %1953
    %1957 = vset.pattern.permute.xlu0 0
    %1958 = vperm.xlu0 %1957, %v1948
    %v1959 = vpop.permute.xlu0 %1958
    %1962 = vset.pattern.permute.xlu0 0
    %1963 = vperm.xlu0 %1962, %v1949
    %v1964 = vpop.permute.xlu0 %1963
    %1967 = vset.pattern.permute.xlu0 0
    %1968 = vperm.xlu0 %1967, %v1950
    %v1969 = vpop.permute.xlu0 %1968
    %v1971 = vmul.f32 %v1875, %v1954
    %v1972 = vmul.f32 %v1876, %v1959
    %v1973 = vmul.f32 %v1877, %v1964
    %v1974 = vmul.f32 %v1878, %v1969
    %1976 = vset.pattern.permute.xlu0 1
    %1977 = vperm.xlu0 %1976, %v1899
    %v1978 = vpop.permute.xlu0 %1977
    %1981 = vset.pattern.permute.xlu0 1
    %1982 = vperm.xlu0 %1981, %v1900
    %v1983 = vpop.permute.xlu0 %1982
    %1986 = vset.pattern.permute.xlu0 1
    %1987 = vperm.xlu0 %1986, %v1901
    %v1988 = vpop.permute.xlu0 %1987
    %1991 = vset.pattern.permute.xlu0 1
    %1992 = vperm.xlu0 %1991, %v1902
    %v1993 = vpop.permute.xlu0 %1992
    %v1995 = vadd.f32 %v1971, %v1978
    %v1996 = vadd.f32 %v1972, %v1983
    %v1997 = vadd.f32 %v1973, %v1988
    %v1998 = vadd.f32 %v1974, %v1993
    %v1999 = vmax.f32 %v1995, 0.0
    %v2000 = vmax.f32 %v1996, 0.0
    %v2001 = vmax.f32 %v1997, 0.0
    %v2002 = vmax.f32 %v1998, 0.0
    %2003 = vst.msk [vmem:[%s11] sm:$0xff] %vm1858, %v1999
    %2004 = vst.msk [vmem:[%s11 + $0x8] sm:$0xff] %vm1858, %v2000
    %2005 = vst.msk [vmem:[%s11 + $0x10] sm:$0xff] %vm1858, %v2001
    %2006 = vst.msk [vmem:[%s11 + $0x18] sm:$0xff] %vm1858, %v2002
    // Predicated region
    $region42: #{msdn_first_layer_forward.1} parent=1 // pred_check
      _
    $region43: #{msdn_first_layer_forward.1} parent=1 // pred_check_branch
      %2008 = sbr.rel (0) target = $region45
    $region44: #{msdn_first_layer_forward.1} parent=1 // pred_region
      _
    $region45: #{msdn_first_layer_forward.1} parent=1 // pred_fallthru
      _
    // Predicated region
    $region46: #{msdn_first_layer_forward.1} parent=1 // pred_check
      _
    $region47: #{msdn_first_layer_forward.1} parent=1 // pred_check_branch
      %2010 = sbr.rel (0) target = $region49
    $region48: #{msdn_first_layer_forward.1} parent=1 // pred_region
      _
    $region49: #{msdn_first_layer_forward.1} parent=1 // pred_fallthru
      _
    // Predicated region
    $region50: #{msdn_first_layer_forward.1} parent=1 // pred_check
      _
    $region51: #{msdn_first_layer_forward.1} parent=1 // pred_check_branch
      %2012 = sbr.rel (0) target = $region53
    $region52: #{msdn_first_layer_forward.1} parent=1 // pred_region
      _
    $region53: #{msdn_first_layer_forward.1} parent=1 // pred_fallthru
      _
    // Predicated region
    $region54: #{msdn_first_layer_forward.1} parent=1 // pred_check
      _
    $region55: #{msdn_first_layer_forward.1} parent=1 // pred_check_branch
      %2014 = sbr.rel (0) target = $region57
    $region56: #{msdn_first_layer_forward.1} parent=1 // pred_region
      _
    $region57: #{msdn_first_layer_forward.1} parent=1 // pred_fallthru
      _
    // Predicated region
    $region58: #{msdn_first_layer_forward.1} parent=1 // pred_check
      _
    $region59: #{msdn_first_layer_forward.1} parent=1 // pred_check_branch
      %2016 = sbr.rel (0) target = $region61
    $region60: #{msdn_first_layer_forward.1} parent=1 // pred_region
      _
    $region61: #{msdn_first_layer_forward.1} parent=1 // pred_fallthru
      _
    // Predicated region
    $region62: #{msdn_first_layer_forward.1} parent=1 // pred_check
      _
    $region63: #{msdn_first_layer_forward.1} parent=1 // pred_check_branch
      %2018 = sbr.rel (0) target = $region65
    $region64: #{msdn_first_layer_forward.1} parent=1 // pred_region
      _
    $region65: #{msdn_first_layer_forward.1} parent=1 // pred_fallthru
      _
    %2019 = vsyncpa [#allocation5], 1

</llo_original>
